<compile_context>
chip_gen: v7x
topology: tpu7x:2x2x1
jax: 0.10.0
libtpu: 0.0.40
codegen_flags: <defaults>
</compile_context>

<pallas_src>
import math
import jax
import jax.numpy as jnp
from jax.experimental import pallas as pl
from jax.experimental.pallas import tpu as pltpu


# DFT matmul operand dtype.  bf16 roughly triples MXU throughput on v6e/v7x, but costs
# ~2-3 decimal digits on the rfft/irfft round trip -- validate against the torch
# reference before flipping this (bf16 FFN weights are the safe first step, done below).
DFT_MATMUL_DTYPE = jnp.float32


def _round_up(v, m):
    return ((v + m - 1) // m) * m


def _pick_bt(B):
    """Batch-tile size: fold up to 8 sequences per grid step, but keep >=2 grid steps
    when B >= 2 so megacore (v7x) has two parallel slices."""
    cap = min(8, max(1, B // 2))
    for c in range(cap, 0, -1):
        if B % c == 0:
            return c
    return 1


def _dft_matrices(S, Fp, dtype):
    """Stacked real-DFT matrices matching torch.fft.rfft / irfft(n=S) exactly.

    Returns CD [2Fp, S] (rfft: rows 0..Fp = cos, rows Fp..2Fp = -sin) and
            DD [S, 2Fp] (irfft, with DC/Nyquist scaling folded in).
    Rows/cols >= F (= S//2+1) are zero padding (numerically inert).
    """
    F = S // 2 + 1
    k = jnp.arange(Fp, dtype=jnp.int32)[:, None]          # [Fp, 1]
    n = jnp.arange(S, dtype=jnp.int32)[None, :]           # [1, S]
    # (k*n) mod S keeps the cos/sin argument small and exact (int math), important
    # for larger S where 2*pi*k*n/S loses precision in f32.
    ang = (2.0 * jnp.pi / S) * ((k * n) % S).astype(jnp.float32)   # [Fp, S]
    cos = jnp.cos(ang)
    sin = jnp.sin(ang)
    valid = (jnp.arange(Fp) < F).astype(jnp.float32)       # zero out padded rows
    Cr = cos * valid[:, None]
    Ci = -sin * valid[:, None]
    # irfft scaling: DC (and Nyquist when S even) counted once, others twice.
    a = jnp.where(jnp.arange(Fp) == 0, 1.0, 2.0).astype(jnp.float32)
    if S % 2 == 0:
        a = jnp.where(jnp.arange(Fp) == F - 1, 1.0, a)
    a = a * valid
    Dr = (a[None, :] / S) * cos.T                          # [S, Fp]
    Di = -(a[None, :] / S) * sin.T                         # [S, Fp]
    CD = jnp.concatenate([Cr, Ci], axis=0).astype(dtype)   # [2Fp, S]
    DD = jnp.concatenate([Dr, Di], axis=1).astype(dtype)   # [S, 2Fp]
    return CD, DD


def _vmem_limit_bytes(bt, S, H, I, Fp):
    """Conservative scoped-VMEM request: weights + in/out blocks + intermediates,
    with generous headroom, capped well below v7x's 64 MiB physical VMEM."""
    f32, bf16 = 4, 2
    rows = bt * S
    act = rows * H * f32 * 2 * 2                                   # x + out, double buffered
    consts = (4 * Fp * S + 2 * Fp * H + 4 * H + I) * f32 + 2 * H * I * bf16
    consts *= 2                                                    # worst case double buffered
    scratch = rows * (I + 8 * H) * f32 + 4 * Fp * H * f32          # FFN / DFT intermediates
    est = act + consts + scratch
    return int(min(max(4 * est, 16 * 2**20), 48 * 2**20))


def _const_spec(shape, single_buffer):
    idx = lambda g: tuple(0 for _ in shape)
    if single_buffer:
        # Constant index map -> a single resident copy is enough; halves weight VMEM.
        return pl.BlockSpec(shape, idx, pipeline_mode=pl.Buffered(1))
    return pl.BlockSpec(shape, idx)


def _build_freqmix_call(B, S, H, I, Fp, bt, single_buffer_weights):
    rows = bt * S
    F2 = 2 * Fp
    grid = (B // bt,)

    def kernel(x_ref, cd_ref, dd_ref, wr_ref, wi_ref,
               g1_ref, be1_ref, w1_ref, bf1_ref, w2_ref, bf2_ref,
               g2_ref, be2_ref, o_ref):
        eps = 1e-12
        x2 = x_ref[...]                                    # [bt*S, H]  f32, token-major

        cd = cd_ref[...]                                   # [2Fp, S]
        dd = dd_ref[...]                                   # [S, 2Fp]
        wr = wr_ref[...]                                   # [Fp, H]
        wi = wi_ref[...]                                   # [Fp, H]

        # ---- frequency mixing: one stacked rfft matmul + one stacked irfft matmul ----
        ys = []
        for b in range(bt):                                # static unroll, bt is small
            xb = x2[b * S:(b + 1) * S, :]                  # [S, H]  (sublane-aligned slice)
            xf = jnp.dot(cd, xb.astype(cd.dtype),
                         preferred_element_type=jnp.float32)         # [2Fp, H] = [re; im]
            xr = xf[:Fp, :]
            xi = xf[Fp:, :]
            # complex filter (4-mul form; Karatsuba trades 1 VPU mul for 3 adds -> no win)
            yf = jnp.concatenate([xr * wr - xi * wi,
                                  xr * wi + xi * wr], axis=0)         # [2Fp, H]
            ys.append(jnp.dot(dd, yf.astype(dd.dtype),
                              preferred_element_type=jnp.float32))    # [S, H]
        y2 = ys[0] if bt == 1 else jnp.concatenate(ys, axis=0)        # [bt*S, H]

        # ---- LayerNorm(dropout(y) + x); dropout = identity at eval ----
        h = y2 + x2
        mu = jnp.mean(h, axis=-1, keepdims=True)
        d = h - mu
        var = jnp.mean(d * d, axis=-1, keepdims=True)
        h1 = d * jax.lax.rsqrt(var + eps) * g1_ref[...] + be1_ref[...]

        # ---- FeedForward: bf16 MXU operands, f32 accumulation; elementwise stays f32 ----
        f = jnp.dot(h1.astype(w1_ref.dtype), w1_ref[...],
                    preferred_element_type=jnp.float32) + bf1_ref[...]
        # TODO(synk): reference FeedForward uses erf-based GELU; tanh approximation here.
        c = math.sqrt(2.0 / math.pi)
        f = 0.5 * f * (1.0 + jnp.tanh(c * (f + 0.044715 * f * f * f)))
        o = jnp.dot(f.astype(w2_ref.dtype), w2_ref[...],
                    preferred_element_type=jnp.float32) + bf2_ref[...]

        # ---- LayerNorm(dropout(o) + h1) ----
        h2 = o + h1
        mu2 = jnp.mean(h2, axis=-1, keepdims=True)
        d2 = h2 - mu2
        var2 = jnp.mean(d2 * d2, axis=-1, keepdims=True)
        o_ref[...] = d2 * jax.lax.rsqrt(var2 + eps) * g2_ref[...] + be2_ref[...]

    cs = lambda shape: _const_spec(shape, single_buffer_weights)

    return pl.pallas_call(
        kernel,
        out_shape=jax.ShapeDtypeStruct((B * S, H), jnp.float32),
        grid_spec=pltpu.PrefetchScalarGridSpec(
            num_scalar_prefetch=0,
            grid=grid,
            in_specs=[
                pl.BlockSpec((rows, H), lambda g: (g, 0)),   # x (token-major batch tile)
                cs((F2, S)), cs((S, F2)),                    # stacked rfft / irfft matrices
                cs((Fp, H)), cs((Fp, H)),                    # complex filter (padded)
                cs((1, H)), cs((1, H)),                      # LN1 gamma / beta
                cs((H, I)), cs((1, I)),                      # FFN W1 (bf16) / b1
                cs((I, H)), cs((1, H)),                      # FFN W2 (bf16) / b2
                cs((1, H)), cs((1, H)),                      # LN2 gamma / beta
            ],
            out_specs=pl.BlockSpec((rows, H), lambda g: (g, 0)),
        ),
        compiler_params=pltpu.CompilerParams(
            dimension_semantics=("parallel",),
            vmem_limit_bytes=_vmem_limit_bytes(bt, S, H, I, Fp),
        ),
    )


def freqmixrec_block(x, attention_mask, params, *, bt=None):
    """x: [B, S, H] float32.  attention_mask: accepted but unused (filter layer ignores it)."""
    del attention_mask
    B, S, H = x.shape
    I = params["w1"].shape[1]
    F = S // 2 + 1
    Fp = _round_up(F, 8)                      # pad frequency dim to a full sublane multiple

    if bt is None:
        bt = _pick_bt(B)
    if (bt * S) % 8 != 0:
        bt = B                                # full-extent block is exempt from the (8,128) rule

    CD, DD = _dft_matrices(S, Fp, DFT_MATMUL_DTYPE)
    pad = Fp - F
    WR = jnp.pad(params["wr"], ((0, pad), (0, 0)))
    WI = jnp.pad(params["wi"], ((0, pad), (0, 0)))
    # bf16 matmul operands, f32 accumulation (review item); LN / biases stay f32.
    W1 = params["w1"].astype(jnp.bfloat16)
    W2 = params["w2"].astype(jnp.bfloat16)

    x2 = x.reshape(B * S, H).astype(jnp.float32)   # token-major fold (free reshape, host side)
    args = (x2, CD, DD, WR, WI,
            params["ln1_g"], params["ln1_b"], W1, params["b1"],
            W2, params["b2"], params["ln2_g"], params["ln2_b"])

    def run(single_buffer_weights):
        call = _build_freqmix_call(B, S, H, I, Fp, bt, single_buffer_weights)
        out2 = call(*args)
        jax.block_until_ready(out2)
        return out2.reshape(B, S, H)

    try:
        # Preferred path: constant weights held in a single VMEM buffer.
        return run(True)
    except Exception:
        # Fallback if pl.Buffered(1) is rejected by this jax/libtpu build:
        # identical kernel, default double-buffered weight blocks.
        return run(False)


def init_params(key, S, H, I):
    F = S // 2 + 1
    ks = jax.random.split(key, 4)
    std = 0.02
    return {
        "wr": jax.random.normal(ks[0], (F, H), jnp.float32) * std,
        "wi": jax.random.normal(ks[1], (F, H), jnp.float32) * std,
        "ln1_g": jnp.ones((1, H), jnp.float32),
        "ln1_b": jnp.zeros((1, H), jnp.float32),
        "w1": jax.random.normal(ks[2], (H, I), jnp.float32) * std,
        "b1": jnp.zeros((1, I), jnp.float32),
        "w2": jax.random.normal(ks[3], (I, H), jnp.float32) * std,
        "b2": jnp.zeros((1, H), jnp.float32),
        "ln2_g": jnp.ones((1, H), jnp.float32),
        "ln2_b": jnp.zeros((1, H), jnp.float32),
    }


if __name__ == "__main__":
    B, S, H = 2, 8, 32
    I = 4 * H

    key = jax.random.PRNGKey(0)
    kx, kp = jax.random.split(key)
    x = jax.random.normal(kx, (B, S, H), jnp.float32)
    attention_mask = jnp.zeros((B, 1, 1, S), jnp.float32)  # accepted but unused
    params = init_params(kp, S, H, I)

    out = freqmixrec_block(x, attention_mask, params)
    jax.block_until_ready(out)
    assert out.shape == (B, S, H) and out.dtype == jnp.float32
    print("KERNEL_OK")
</pallas_src>

<mosaic_0001>
module attributes {stable_mosaic.version = 11 : i64} {
  func.func @kernel(%arg0: i32, %arg1: memref<8x32xf32, #tpu.memory_space<vmem>>, %arg2: memref<16x8xf32, #tpu.memory_space<vmem>>, %arg3: memref<8x16xf32, #tpu.memory_space<vmem>>, %arg4: memref<8x32xf32, #tpu.memory_space<vmem>>, %arg5: memref<8x32xf32, #tpu.memory_space<vmem>>, %arg6: memref<1x32xf32, #tpu.memory_space<vmem>>, %arg7: memref<1x32xf32, #tpu.memory_space<vmem>>, %arg8: memref<32x128xbf16, #tpu.memory_space<vmem>>, %arg9: memref<1x128xf32, #tpu.memory_space<vmem>>, %arg10: memref<128x32xbf16, #tpu.memory_space<vmem>>, %arg11: memref<1x32xf32, #tpu.memory_space<vmem>>, %arg12: memref<1x32xf32, #tpu.memory_space<vmem>>, %arg13: memref<1x32xf32, #tpu.memory_space<vmem>>, %arg14: memref<8x32xf32, #tpu.memory_space<vmem>>) attributes {dimension_semantics = [#tpu.dimension_semantics<parallel>], iteration_bounds = array<i64: 2>, scalar_prefetch = 0 : i64, scratch_operands = 0 : i64, tpu.core_type = #tpu.core_type<tc>, window_params = [{transform_indices = @transform_0, window_bounds = array<i64: 8, 32>}, {pipeline_mode = #tpu.pipeline_mode<synchronous>, transform_indices = @transform_1, window_bounds = array<i64: 16, 8>}, {pipeline_mode = #tpu.pipeline_mode<synchronous>, transform_indices = @transform_2, window_bounds = array<i64: 8, 16>}, {pipeline_mode = #tpu.pipeline_mode<synchronous>, transform_indices = @transform_3, window_bounds = array<i64: 8, 32>}, {pipeline_mode = #tpu.pipeline_mode<synchronous>, transform_indices = @transform_4, window_bounds = array<i64: 8, 32>}, {pipeline_mode = #tpu.pipeline_mode<synchronous>, transform_indices = @transform_5, window_bounds = array<i64: 1, 32>}, {pipeline_mode = #tpu.pipeline_mode<synchronous>, transform_indices = @transform_6, window_bounds = array<i64: 1, 32>}, {pipeline_mode = #tpu.pipeline_mode<synchronous>, transform_indices = @transform_7, window_bounds = array<i64: 32, 128>}, {pipeline_mode = #tpu.pipeline_mode<synchronous>, transform_indices = @transform_8, window_bounds = array<i64: 1, 128>}, {pipeline_mode = #tpu.pipeline_mode<synchronous>, transform_indices = @transform_9, window_bounds = array<i64: 128, 32>}, {pipeline_mode = #tpu.pipeline_mode<synchronous>, transform_indices = @transform_10, window_bounds = array<i64: 1, 32>}, {pipeline_mode = #tpu.pipeline_mode<synchronous>, transform_indices = @transform_11, window_bounds = array<i64: 1, 32>}, {pipeline_mode = #tpu.pipeline_mode<synchronous>, transform_indices = @transform_12, window_bounds = array<i64: 1, 32>}, {transform_indices = @transform_13, window_bounds = array<i64: 8, 32>}]} {
    %c0 = arith.constant 0 : index
    %c0_0 = arith.constant 0 : index
    %0 = vector.load %arg1[%c0, %c0_0] : memref<8x32xf32, #tpu.memory_space<vmem>>, vector<8x32xf32>
    %c0_1 = arith.constant 0 : index
    %c0_2 = arith.constant 0 : index
    %1 = vector.load %arg2[%c0_1, %c0_2] : memref<16x8xf32, #tpu.memory_space<vmem>>, vector<16x8xf32>
    %c0_3 = arith.constant 0 : index
    %c0_4 = arith.constant 0 : index
    %2 = vector.load %arg3[%c0_3, %c0_4] : memref<8x16xf32, #tpu.memory_space<vmem>>, vector<8x16xf32>
    %c0_5 = arith.constant 0 : index
    %c0_6 = arith.constant 0 : index
    %3 = vector.load %arg4[%c0_5, %c0_6] : memref<8x32xf32, #tpu.memory_space<vmem>>, vector<8x32xf32>
    %c0_7 = arith.constant 0 : index
    %c0_8 = arith.constant 0 : index
    %4 = vector.load %arg5[%c0_7, %c0_8] : memref<8x32xf32, #tpu.memory_space<vmem>>, vector<8x32xf32>
    %cst = arith.constant dense<0.000000e+00> : vector<16x32xf32>
    %5 = tpu.matmul %1, %0, %cst {dimension_numbers = #tpu.dot_dimension_numbers<[1], [0], [0], [1], [0, 0, 1, 1], [], []>} : vector<16x8xf32>, vector<8x32xf32>, vector<16x32xf32> -> vector<16x32xf32>
    %6 = vector.extract_strided_slice %5 {offsets = [0, 0], sizes = [8, 32], strides = [1, 1]} : vector<16x32xf32> to vector<8x32xf32>
    %7 = vector.extract_strided_slice %5 {offsets = [8, 0], sizes = [8, 32], strides = [1, 1]} : vector<16x32xf32> to vector<8x32xf32>
    %8 = arith.mulf %6, %3 : vector<8x32xf32>
    %9 = arith.mulf %7, %4 : vector<8x32xf32>
    %10 = arith.subf %8, %9 : vector<8x32xf32>
    %11 = arith.mulf %6, %4 : vector<8x32xf32>
    %12 = arith.mulf %7, %3 : vector<8x32xf32>
    %13 = arith.addf %11, %12 : vector<8x32xf32>
    %14 = tpu.concatenate %10, %13 in 0 : vector<8x32xf32>, vector<8x32xf32> -> vector<16x32xf32>
    %cst_9 = arith.constant dense<0.000000e+00> : vector<8x32xf32>
    %15 = tpu.matmul %2, %14, %cst_9 {dimension_numbers = #tpu.dot_dimension_numbers<[1], [0], [0], [1], [0, 0, 1, 1], [], []>} : vector<8x16xf32>, vector<16x32xf32>, vector<8x32xf32> -> vector<8x32xf32>
    %16 = arith.addf %15, %0 : vector<8x32xf32>
    %cst_10 = arith.constant dense<0.000000e+00> : vector<8xf32>
    %17 = vector.multi_reduction <add>, %16, %cst_10 [1] : vector<8x32xf32> to vector<8xf32>
    %18 = vector.shape_cast %17 : vector<8xf32> to vector<8x1xf32>
    %cst_11 = arith.constant 3.200000e+01 : f32
    %19 = vector.broadcast %cst_11 : f32 to vector<8x1xf32>
    %20 = arith.divf %18, %19 : vector<8x1xf32>
    %21 = vector.broadcast %20 : vector<8x1xf32> to vector<8x32xf32>
    %22 = arith.subf %16, %21 : vector<8x32xf32>
    %23 = arith.mulf %22, %22 : vector<8x32xf32>
    %cst_12 = arith.constant dense<0.000000e+00> : vector<8xf32>
    %24 = vector.multi_reduction <add>, %23, %cst_12 [1] : vector<8x32xf32> to vector<8xf32>
    %25 = vector.shape_cast %24 : vector<8xf32> to vector<8x1xf32>
    %cst_13 = arith.constant 3.200000e+01 : f32
    %26 = vector.broadcast %cst_13 : f32 to vector<8x1xf32>
    %27 = arith.divf %25, %26 : vector<8x1xf32>
    %cst_14 = arith.constant 9.99999996E-13 : f32
    %28 = vector.broadcast %cst_14 : f32 to vector<8x1xf32>
    %29 = arith.addf %27, %28 : vector<8x1xf32>
    %30 = math.rsqrt %29 : vector<8x1xf32>
    %31 = vector.broadcast %30 : vector<8x1xf32> to vector<8x32xf32>
    %32 = arith.mulf %22, %31 : vector<8x32xf32>
    %c0_15 = arith.constant 0 : index
    %c0_16 = arith.constant 0 : index
    %33 = vector.load %arg6[%c0_15, %c0_16] : memref<1x32xf32, #tpu.memory_space<vmem>>, vector<1x32xf32>
    %34 = vector.broadcast %33 : vector<1x32xf32> to vector<8x32xf32>
    %35 = arith.mulf %32, %34 : vector<8x32xf32>
    %c0_17 = arith.constant 0 : index
    %c0_18 = arith.constant 0 : index
    %36 = vector.load %arg7[%c0_17, %c0_18] : memref<1x32xf32, #tpu.memory_space<vmem>>, vector<1x32xf32>
    %37 = vector.broadcast %36 : vector<1x32xf32> to vector<8x32xf32>
    %38 = arith.addf %35, %37 : vector<8x32xf32>
    %39 = arith.truncf %38 : vector<8x32xf32> to vector<8x32xbf16>
    %c0_19 = arith.constant 0 : index
    %c0_20 = arith.constant 0 : index
    %40 = vector.load %arg8[%c0_19, %c0_20] : memref<32x128xbf16, #tpu.memory_space<vmem>>, vector<32x128xbf16>
    %cst_21 = arith.constant dense<0.000000e+00> : vector<8x128xf32>
    %41 = tpu.matmul %39, %40, %cst_21 {dimension_numbers = #tpu.dot_dimension_numbers<[1], [0], [0], [1], [0, 0, 1, 1], [], []>} : vector<8x32xbf16>, vector<32x128xbf16>, vector<8x128xf32> -> vector<8x128xf32>
    %c0_22 = arith.constant 0 : index
    %c0_23 = arith.constant 0 : index
    %42 = vector.load %arg9[%c0_22, %c0_23] : memref<1x128xf32, #tpu.memory_space<vmem>>, vector<1x128xf32>
    %43 = vector.broadcast %42 : vector<1x128xf32> to vector<8x128xf32>
    %44 = arith.addf %41, %43 : vector<8x128xf32>
    %cst_24 = arith.constant 5.000000e-01 : f32
    %45 = vector.broadcast %cst_24 : f32 to vector<8x128xf32>
    %46 = arith.mulf %45, %44 : vector<8x128xf32>
    %cst_25 = arith.constant 4.471500e-02 : f32
    %47 = vector.broadcast %cst_25 : f32 to vector<8x128xf32>
    %48 = arith.mulf %47, %44 : vector<8x128xf32>
    %49 = arith.mulf %48, %44 : vector<8x128xf32>
    %50 = arith.mulf %49, %44 : vector<8x128xf32>
    %51 = arith.addf %44, %50 : vector<8x128xf32>
    %cst_26 = arith.constant 0.797884583 : f32
    %52 = vector.broadcast %cst_26 : f32 to vector<8x128xf32>
    %53 = arith.mulf %52, %51 : vector<8x128xf32>
    %54 = math.tanh %53 : vector<8x128xf32>
    %cst_27 = arith.constant 1.000000e+00 : f32
    %55 = vector.broadcast %cst_27 : f32 to vector<8x128xf32>
    %56 = arith.addf %55, %54 : vector<8x128xf32>
    %57 = arith.mulf %46, %56 : vector<8x128xf32>
    %58 = arith.truncf %57 : vector<8x128xf32> to vector<8x128xbf16>
    %c0_28 = arith.constant 0 : index
    %c0_29 = arith.constant 0 : index
    %59 = vector.load %arg10[%c0_28, %c0_29] : memref<128x32xbf16, #tpu.memory_space<vmem>>, vector<128x32xbf16>
    %cst_30 = arith.constant dense<0.000000e+00> : vector<8x32xf32>
    %60 = tpu.matmul %58, %59, %cst_30 {dimension_numbers = #tpu.dot_dimension_numbers<[1], [0], [0], [1], [0, 0, 1, 1], [], []>} : vector<8x128xbf16>, vector<128x32xbf16>, vector<8x32xf32> -> vector<8x32xf32>
    %c0_31 = arith.constant 0 : index
    %c0_32 = arith.constant 0 : index
    %61 = vector.load %arg11[%c0_31, %c0_32] : memref<1x32xf32, #tpu.memory_space<vmem>>, vector<1x32xf32>
    %62 = vector.broadcast %61 : vector<1x32xf32> to vector<8x32xf32>
    %63 = arith.addf %60, %62 : vector<8x32xf32>
    %64 = arith.addf %63, %38 : vector<8x32xf32>
    %cst_33 = arith.constant dense<0.000000e+00> : vector<8xf32>
    %65 = vector.multi_reduction <add>, %64, %cst_33 [1] : vector<8x32xf32> to vector<8xf32>
    %66 = vector.shape_cast %65 : vector<8xf32> to vector<8x1xf32>
    %cst_34 = arith.constant 3.200000e+01 : f32
    %67 = vector.broadcast %cst_34 : f32 to vector<8x1xf32>
    %68 = arith.divf %66, %67 : vector<8x1xf32>
    %69 = vector.broadcast %68 : vector<8x1xf32> to vector<8x32xf32>
    %70 = arith.subf %64, %69 : vector<8x32xf32>
    %71 = arith.mulf %70, %70 : vector<8x32xf32>
    %cst_35 = arith.constant dense<0.000000e+00> : vector<8xf32>
    %72 = vector.multi_reduction <add>, %71, %cst_35 [1] : vector<8x32xf32> to vector<8xf32>
    %73 = vector.shape_cast %72 : vector<8xf32> to vector<8x1xf32>
    %cst_36 = arith.constant 3.200000e+01 : f32
    %74 = vector.broadcast %cst_36 : f32 to vector<8x1xf32>
    %75 = arith.divf %73, %74 : vector<8x1xf32>
    %cst_37 = arith.constant 9.99999996E-13 : f32
    %76 = vector.broadcast %cst_37 : f32 to vector<8x1xf32>
    %77 = arith.addf %75, %76 : vector<8x1xf32>
    %78 = math.rsqrt %77 : vector<8x1xf32>
    %79 = vector.broadcast %78 : vector<8x1xf32> to vector<8x32xf32>
    %80 = arith.mulf %70, %79 : vector<8x32xf32>
    %c0_38 = arith.constant 0 : index
    %c0_39 = arith.constant 0 : index
    %81 = vector.load %arg12[%c0_38, %c0_39] : memref<1x32xf32, #tpu.memory_space<vmem>>, vector<1x32xf32>
    %82 = vector.broadcast %81 : vector<1x32xf32> to vector<8x32xf32>
    %83 = arith.mulf %80, %82 : vector<8x32xf32>
    %c0_40 = arith.constant 0 : index
    %c0_41 = arith.constant 0 : index
    %84 = vector.load %arg13[%c0_40, %c0_41] : memref<1x32xf32, #tpu.memory_space<vmem>>, vector<1x32xf32>
    %85 = vector.broadcast %84 : vector<1x32xf32> to vector<8x32xf32>
    %86 = arith.addf %83, %85 : vector<8x32xf32>
    %c0_42 = arith.constant 0 : index
    %c0_43 = arith.constant 0 : index
    %87 = vector.load %arg14[%c0_42, %c0_43] : memref<8x32xf32, #tpu.memory_space<vmem>>, vector<8x32xf32>
    tpu.vector_store %arg14[%c0_42, %c0_43], %86 {strides = array<i32>} : memref<8x32xf32, #tpu.memory_space<vmem>>, vector<8x32xf32>,
    return
  }
  func.func @transform_0(%arg0: i32) -> (i32, i32) {
    %c0_i32 = arith.constant 0 : i32
    %c0_i32_0 = arith.constant 0 : i32
    return %arg0, %c0_i32 : i32, i32
  }
  func.func @transform_1(%arg0: i32) -> (i32, i32) {
    %c0_i32 = arith.constant 0 : i32
    %c0_i32_0 = arith.constant 0 : i32
    %c0_i32_1 = arith.constant 0 : i32
    return %c0_i32, %c0_i32_0 : i32, i32
  }
  func.func @transform_2(%arg0: i32) -> (i32, i32) {
    %c0_i32 = arith.constant 0 : i32
    %c0_i32_0 = arith.constant 0 : i32
    %c0_i32_1 = arith.constant 0 : i32
    return %c0_i32, %c0_i32_0 : i32, i32
  }
  func.func @transform_3(%arg0: i32) -> (i32, i32) {
    %c0_i32 = arith.constant 0 : i32
    %c0_i32_0 = arith.constant 0 : i32
    %c0_i32_1 = arith.constant 0 : i32
    return %c0_i32, %c0_i32_0 : i32, i32
  }
  func.func @transform_4(%arg0: i32) -> (i32, i32) {
    %c0_i32 = arith.constant 0 : i32
    %c0_i32_0 = arith.constant 0 : i32
    %c0_i32_1 = arith.constant 0 : i32
    return %c0_i32, %c0_i32_0 : i32, i32
  }
  func.func @transform_5(%arg0: i32) -> (i32, i32) {
    %c0_i32 = arith.constant 0 : i32
    %c0_i32_0 = arith.constant 0 : i32
    %c0_i32_1 = arith.constant 0 : i32
    return %c0_i32, %c0_i32_0 : i32, i32
  }
  func.func @transform_6(%arg0: i32) -> (i32, i32) {
    %c0_i32 = arith.constant 0 : i32
    %c0_i32_0 = arith.constant 0 : i32
    %c0_i32_1 = arith.constant 0 : i32
    return %c0_i32, %c0_i32_0 : i32, i32
  }
  func.func @transform_7(%arg0: i32) -> (i32, i32) {
    %c0_i32 = arith.constant 0 : i32
    %c0_i32_0 = arith.constant 0 : i32
    %c0_i32_1 = arith.constant 0 : i32
    return %c0_i32, %c0_i32_0 : i32, i32
  }
  func.func @transform_8(%arg0: i32) -> (i32, i32) {
    %c0_i32 = arith.constant 0 : i32
    %c0_i32_0 = arith.constant 0 : i32
    %c0_i32_1 = arith.constant 0 : i32
    return %c0_i32, %c0_i32_0 : i32, i32
  }
  func.func @transform_9(%arg0: i32) -> (i32, i32) {
    %c0_i32 = arith.constant 0 : i32
    %c0_i32_0 = arith.constant 0 : i32
    %c0_i32_1 = arith.constant 0 : i32
    return %c0_i32, %c0_i32_0 : i32, i32
  }
  func.func @transform_10(%arg0: i32) -> (i32, i32) {
    %c0_i32 = arith.constant 0 : i32
    %c0_i32_0 = arith.constant 0 : i32
    %c0_i32_1 = arith.constant 0 : i32
    return %c0_i32, %c0_i32_0 : i32, i32
  }
  func.func @transform_11(%arg0: i32) -> (i32, i32) {
    %c0_i32 = arith.constant 0 : i32
    %c0_i32_0 = arith.constant 0 : i32
    %c0_i32_1 = arith.constant 0 : i32
    return %c0_i32, %c0_i32_0 : i32, i32
  }
  func.func @transform_12(%arg0: i32) -> (i32, i32) {
    %c0_i32 = arith.constant 0 : i32
    %c0_i32_0 = arith.constant 0 : i32
    %c0_i32_1 = arith.constant 0 : i32
    return %c0_i32, %c0_i32_0 : i32, i32
  }
  func.func @transform_13(%arg0: i32) -> (i32, i32) {
    %c0_i32 = arith.constant 0 : i32
    %c0_i32_0 = arith.constant 0 : i32
    return %arg0, %c0_i32 : i32, i32
  }
}

module attributes {stable_mosaic.version = 11 : i64} {
  func.func @kernel(%arg0: i32, %arg1: memref<8x32xf32, #tpu.memory_space<vmem>>, %arg2: memref<16x8xf32, #tpu.memory_space<vmem>>, %arg3: memref<8x16xf32, #tpu.memory_space<vmem>>, %arg4: memref<8x32xf32, #tpu.memory_space<vmem>>, %arg5: memref<8x32xf32, #tpu.memory_space<vmem>>, %arg6: memref<1x32xf32, #tpu.memory_space<vmem>>, %arg7: memref<1x32xf32, #tpu.memory_space<vmem>>, %arg8: memref<32x128xbf16, #tpu.memory_space<vmem>>, %arg9: memref<1x128xf32, #tpu.memory_space<vmem>>, %arg10: memref<128x32xbf16, #tpu.memory_space<vmem>>, %arg11: memref<1x32xf32, #tpu.memory_space<vmem>>, %arg12: memref<1x32xf32, #tpu.memory_space<vmem>>, %arg13: memref<1x32xf32, #tpu.memory_space<vmem>>, %arg14: memref<8x32xf32, #tpu.memory_space<vmem>>) attributes {dimension_semantics = [#tpu.dimension_semantics<parallel>], iteration_bounds = array<i64: 2>, scalar_prefetch = 0 : i64, scratch_operands = 0 : i64, tpu.core_type = #tpu.core_type<tc>, window_params = [{transform_indices = @transform_0, window_bounds = array<i64: 8, 32>}, {pipeline_mode = #tpu.pipeline_mode<synchronous>, transform_indices = @transform_1, window_bounds = array<i64: 16, 8>}, {pipeline_mode = #tpu.pipeline_mode<synchronous>, transform_indices = @transform_2, window_bounds = array<i64: 8, 16>}, {pipeline_mode = #tpu.pipeline_mode<synchronous>, transform_indices = @transform_3, window_bounds = array<i64: 8, 32>}, {pipeline_mode = #tpu.pipeline_mode<synchronous>, transform_indices = @transform_4, window_bounds = array<i64: 8, 32>}, {pipeline_mode = #tpu.pipeline_mode<synchronous>, transform_indices = @transform_5, window_bounds = array<i64: 1, 32>}, {pipeline_mode = #tpu.pipeline_mode<synchronous>, transform_indices = @transform_6, window_bounds = array<i64: 1, 32>}, {pipeline_mode = #tpu.pipeline_mode<synchronous>, transform_indices = @transform_7, window_bounds = array<i64: 32, 128>}, {pipeline_mode = #tpu.pipeline_mode<synchronous>, transform_indices = @transform_8, window_bounds = array<i64: 1, 128>}, {pipeline_mode = #tpu.pipeline_mode<synchronous>, transform_indices = @transform_9, window_bounds = array<i64: 128, 32>}, {pipeline_mode = #tpu.pipeline_mode<synchronous>, transform_indices = @transform_10, window_bounds = array<i64: 1, 32>}, {pipeline_mode = #tpu.pipeline_mode<synchronous>, transform_indices = @transform_11, window_bounds = array<i64: 1, 32>}, {pipeline_mode = #tpu.pipeline_mode<synchronous>, transform_indices = @transform_12, window_bounds = array<i64: 1, 32>}, {transform_indices = @transform_13, window_bounds = array<i64: 8, 32>}]} {
    %c0 = arith.constant 0 : index
    %c0_0 = arith.constant 0 : index
    %0 = vector.load %arg1[%c0, %c0_0] : memref<8x32xf32, #tpu.memory_space<vmem>>, vector<8x32xf32>
    %c0_1 = arith.constant 0 : index
    %c0_2 = arith.constant 0 : index
    %1 = vector.load %arg2[%c0_1, %c0_2] : memref<16x8xf32, #tpu.memory_space<vmem>>, vector<16x8xf32>
    %c0_3 = arith.constant 0 : index
    %c0_4 = arith.constant 0 : index
    %2 = vector.load %arg3[%c0_3, %c0_4] : memref<8x16xf32, #tpu.memory_space<vmem>>, vector<8x16xf32>
    %c0_5 = arith.constant 0 : index
    %c0_6 = arith.constant 0 : index
    %3 = vector.load %arg4[%c0_5, %c0_6] : memref<8x32xf32, #tpu.memory_space<vmem>>, vector<8x32xf32>
    %c0_7 = arith.constant 0 : index
    %c0_8 = arith.constant 0 : index
    %4 = vector.load %arg5[%c0_7, %c0_8] : memref<8x32xf32, #tpu.memory_space<vmem>>, vector<8x32xf32>
    %cst = arith.constant dense<0.000000e+00> : vector<16x32xf32>
    %5 = tpu.matmul %1, %0, %cst {dimension_numbers = #tpu.dot_dimension_numbers<[1], [0], [0], [1], [0, 0, 1, 1], [], []>} : vector<16x8xf32>, vector<8x32xf32>, vector<16x32xf32> -> vector<16x32xf32>
    %6 = vector.extract_strided_slice %5 {offsets = [0, 0], sizes = [8, 32], strides = [1, 1]} : vector<16x32xf32> to vector<8x32xf32>
    %7 = vector.extract_strided_slice %5 {offsets = [8, 0], sizes = [8, 32], strides = [1, 1]} : vector<16x32xf32> to vector<8x32xf32>
    %8 = arith.mulf %6, %3 : vector<8x32xf32>
    %9 = arith.mulf %7, %4 : vector<8x32xf32>
    %10 = arith.subf %8, %9 : vector<8x32xf32>
    %11 = arith.mulf %6, %4 : vector<8x32xf32>
    %12 = arith.mulf %7, %3 : vector<8x32xf32>
    %13 = arith.addf %11, %12 : vector<8x32xf32>
    %14 = tpu.concatenate %10, %13 in 0 : vector<8x32xf32>, vector<8x32xf32> -> vector<16x32xf32>
    %cst_9 = arith.constant dense<0.000000e+00> : vector<8x32xf32>
    %15 = tpu.matmul %2, %14, %cst_9 {dimension_numbers = #tpu.dot_dimension_numbers<[1], [0], [0], [1], [0, 0, 1, 1], [], []>} : vector<8x16xf32>, vector<16x32xf32>, vector<8x32xf32> -> vector<8x32xf32>
    %16 = arith.addf %15, %0 : vector<8x32xf32>
    %cst_10 = arith.constant dense<0.000000e+00> : vector<8xf32>
    %17 = vector.multi_reduction <add>, %16, %cst_10 [1] : vector<8x32xf32> to vector<8xf32>
    %18 = vector.shape_cast %17 : vector<8xf32> to vector<8x1xf32>
    %cst_11 = arith.constant 3.200000e+01 : f32
    %19 = vector.broadcast %cst_11 : f32 to vector<8x1xf32>
    %20 = arith.divf %18, %19 : vector<8x1xf32>
    %21 = vector.broadcast %20 : vector<8x1xf32> to vector<8x32xf32>
    %22 = arith.subf %16, %21 : vector<8x32xf32>
    %23 = arith.mulf %22, %22 : vector<8x32xf32>
    %cst_12 = arith.constant dense<0.000000e+00> : vector<8xf32>
    %24 = vector.multi_reduction <add>, %23, %cst_12 [1] : vector<8x32xf32> to vector<8xf32>
    %25 = vector.shape_cast %24 : vector<8xf32> to vector<8x1xf32>
    %cst_13 = arith.constant 3.200000e+01 : f32
    %26 = vector.broadcast %cst_13 : f32 to vector<8x1xf32>
    %27 = arith.divf %25, %26 : vector<8x1xf32>
    %cst_14 = arith.constant 9.99999996E-13 : f32
    %28 = vector.broadcast %cst_14 : f32 to vector<8x1xf32>
    %29 = arith.addf %27, %28 : vector<8x1xf32>
    %30 = math.rsqrt %29 : vector<8x1xf32>
    %31 = vector.broadcast %30 : vector<8x1xf32> to vector<8x32xf32>
    %32 = arith.mulf %22, %31 : vector<8x32xf32>
    %c0_15 = arith.constant 0 : index
    %c0_16 = arith.constant 0 : index
    %33 = vector.load %arg6[%c0_15, %c0_16] : memref<1x32xf32, #tpu.memory_space<vmem>>, vector<1x32xf32>
    %34 = vector.broadcast %33 : vector<1x32xf32> to vector<8x32xf32>
    %35 = arith.mulf %32, %34 : vector<8x32xf32>
    %c0_17 = arith.constant 0 : index
    %c0_18 = arith.constant 0 : index
    %36 = vector.load %arg7[%c0_17, %c0_18] : memref<1x32xf32, #tpu.memory_space<vmem>>, vector<1x32xf32>
    %37 = vector.broadcast %36 : vector<1x32xf32> to vector<8x32xf32>
    %38 = arith.addf %35, %37 : vector<8x32xf32>
    %39 = arith.truncf %38 : vector<8x32xf32> to vector<8x32xbf16>
    %c0_19 = arith.constant 0 : index
    %c0_20 = arith.constant 0 : index
    %40 = vector.load %arg8[%c0_19, %c0_20] : memref<32x128xbf16, #tpu.memory_space<vmem>>, vector<32x128xbf16>
    %cst_21 = arith.constant dense<0.000000e+00> : vector<8x128xf32>
    %41 = tpu.matmul %39, %40, %cst_21 {dimension_numbers = #tpu.dot_dimension_numbers<[1], [0], [0], [1], [0, 0, 1, 1], [], []>} : vector<8x32xbf16>, vector<32x128xbf16>, vector<8x128xf32> -> vector<8x128xf32>
    %c0_22 = arith.constant 0 : index
    %c0_23 = arith.constant 0 : index
    %42 = vector.load %arg9[%c0_22, %c0_23] : memref<1x128xf32, #tpu.memory_space<vmem>>, vector<1x128xf32>
    %43 = vector.broadcast %42 : vector<1x128xf32> to vector<8x128xf32>
    %44 = arith.addf %41, %43 : vector<8x128xf32>
    %cst_24 = arith.constant 5.000000e-01 : f32
    %45 = vector.broadcast %cst_24 : f32 to vector<8x128xf32>
    %46 = arith.mulf %45, %44 : vector<8x128xf32>
    %cst_25 = arith.constant 4.471500e-02 : f32
    %47 = vector.broadcast %cst_25 : f32 to vector<8x128xf32>
    %48 = arith.mulf %47, %44 : vector<8x128xf32>
    %49 = arith.mulf %48, %44 : vector<8x128xf32>
    %50 = arith.mulf %49, %44 : vector<8x128xf32>
    %51 = arith.addf %44, %50 : vector<8x128xf32>
    %cst_26 = arith.constant 0.797884583 : f32
    %52 = vector.broadcast %cst_26 : f32 to vector<8x128xf32>
    %53 = arith.mulf %52, %51 : vector<8x128xf32>
    %54 = math.tanh %53 : vector<8x128xf32>
    %cst_27 = arith.constant 1.000000e+00 : f32
    %55 = vector.broadcast %cst_27 : f32 to vector<8x128xf32>
    %56 = arith.addf %55, %54 : vector<8x128xf32>
    %57 = arith.mulf %46, %56 : vector<8x128xf32>
    %58 = arith.truncf %57 : vector<8x128xf32> to vector<8x128xbf16>
    %c0_28 = arith.constant 0 : index
    %c0_29 = arith.constant 0 : index
    %59 = vector.load %arg10[%c0_28, %c0_29] : memref<128x32xbf16, #tpu.memory_space<vmem>>, vector<128x32xbf16>
    %cst_30 = arith.constant dense<0.000000e+00> : vector<8x32xf32>
    %60 = tpu.matmul %58, %59, %cst_30 {dimension_numbers = #tpu.dot_dimension_numbers<[1], [0], [0], [1], [0, 0, 1, 1], [], []>} : vector<8x128xbf16>, vector<128x32xbf16>, vector<8x32xf32> -> vector<8x32xf32>
    %c0_31 = arith.constant 0 : index
    %c0_32 = arith.constant 0 : index
    %61 = vector.load %arg11[%c0_31, %c0_32] : memref<1x32xf32, #tpu.memory_space<vmem>>, vector<1x32xf32>
    %62 = vector.broadcast %61 : vector<1x32xf32> to vector<8x32xf32>
    %63 = arith.addf %60, %62 : vector<8x32xf32>
    %64 = arith.addf %63, %38 : vector<8x32xf32>
    %cst_33 = arith.constant dense<0.000000e+00> : vector<8xf32>
    %65 = vector.multi_reduction <add>, %64, %cst_33 [1] : vector<8x32xf32> to vector<8xf32>
    %66 = vector.shape_cast %65 : vector<8xf32> to vector<8x1xf32>
    %cst_34 = arith.constant 3.200000e+01 : f32
    %67 = vector.broadcast %cst_34 : f32 to vector<8x1xf32>
    %68 = arith.divf %66, %67 : vector<8x1xf32>
    %69 = vector.broadcast %68 : vector<8x1xf32> to vector<8x32xf32>
    %70 = arith.subf %64, %69 : vector<8x32xf32>
    %71 = arith.mulf %70, %70 : vector<8x32xf32>
    %cst_35 = arith.constant dense<0.000000e+00> : vector<8xf32>
    %72 = vector.multi_reduction <add>, %71, %cst_35 [1] : vector<8x32xf32> to vector<8xf32>
    %73 = vector.shape_cast %72 : vector<8xf32> to vector<8x1xf32>
    %cst_36 = arith.constant 3.200000e+01 : f32
    %74 = vector.broadcast %cst_36 : f32 to vector<8x1xf32>
    %75 = arith.divf %73, %74 : vector<8x1xf32>
    %cst_37 = arith.constant 9.99999996E-13 : f32
    %76 = vector.broadcast %cst_37 : f32 to vector<8x1xf32>
    %77 = arith.addf %75, %76 : vector<8x1xf32>
    %78 = math.rsqrt %77 : vector<8x1xf32>
    %79 = vector.broadcast %78 : vector<8x1xf32> to vector<8x32xf32>
    %80 = arith.mulf %70, %79 : vector<8x32xf32>
    %c0_38 = arith.constant 0 : index
    %c0_39 = arith.constant 0 : index
    %81 = vector.load %arg12[%c0_38, %c0_39] : memref<1x32xf32, #tpu.memory_space<vmem>>, vector<1x32xf32>
    %82 = vector.broadcast %81 : vector<1x32xf32> to vector<8x32xf32>
    %83 = arith.mulf %80, %82 : vector<8x32xf32>
    %c0_40 = arith.constant 0 : index
    %c0_41 = arith.constant 0 : index
    %84 = vector.load %arg13[%c0_40, %c0_41] : memref<1x32xf32, #tpu.memory_space<vmem>>, vector<1x32xf32>
    %85 = vector.broadcast %84 : vector<1x32xf32> to vector<8x32xf32>
    %86 = arith.addf %83, %85 : vector<8x32xf32>
    %c0_42 = arith.constant 0 : index
    %c0_43 = arith.constant 0 : index
    %87 = vector.load %arg14[%c0_42, %c0_43] : memref<8x32xf32, #tpu.memory_space<vmem>>, vector<8x32xf32>
    tpu.vector_store %arg14[%c0_42, %c0_43], %86 {strides = array<i32>} : memref<8x32xf32, #tpu.memory_space<vmem>>, vector<8x32xf32>,
    return
  }
  func.func @transform_0(%arg0: i32) -> (i32, i32) {
    %c0_i32 = arith.constant 0 : i32
    %c0_i32_0 = arith.constant 0 : i32
    return %arg0, %c0_i32 : i32, i32
  }
  func.func @transform_1(%arg0: i32) -> (i32, i32) {
    %c0_i32 = arith.constant 0 : i32
    %c0_i32_0 = arith.constant 0 : i32
    %c0_i32_1 = arith.constant 0 : i32
    return %c0_i32, %c0_i32_0 : i32, i32
  }
  func.func @transform_2(%arg0: i32) -> (i32, i32) {
    %c0_i32 = arith.constant 0 : i32
    %c0_i32_0 = arith.constant 0 : i32
    %c0_i32_1 = arith.constant 0 : i32
    return %c0_i32, %c0_i32_0 : i32, i32
  }
  func.func @transform_3(%arg0: i32) -> (i32, i32) {
    %c0_i32 = arith.constant 0 : i32
    %c0_i32_0 = arith.constant 0 : i32
    %c0_i32_1 = arith.constant 0 : i32
    return %c0_i32, %c0_i32_0 : i32, i32
  }
  func.func @transform_4(%arg0: i32) -> (i32, i32) {
    %c0_i32 = arith.constant 0 : i32
    %c0_i32_0 = arith.constant 0 : i32
    %c0_i32_1 = arith.constant 0 : i32
    return %c0_i32, %c0_i32_0 : i32, i32
  }
  func.func @transform_5(%arg0: i32) -> (i32, i32) {
    %c0_i32 = arith.constant 0 : i32
    %c0_i32_0 = arith.constant 0 : i32
    %c0_i32_1 = arith.constant 0 : i32
    return %c0_i32, %c0_i32_0 : i32, i32
  }
  func.func @transform_6(%arg0: i32) -> (i32, i32) {
    %c0_i32 = arith.constant 0 : i32
    %c0_i32_0 = arith.constant 0 : i32
    %c0_i32_1 = arith.constant 0 : i32
    return %c0_i32, %c0_i32_0 : i32, i32
  }
  func.func @transform_7(%arg0: i32) -> (i32, i32) {
    %c0_i32 = arith.constant 0 : i32
    %c0_i32_0 = arith.constant 0 : i32
    %c0_i32_1 = arith.constant 0 : i32
    return %c0_i32, %c0_i32_0 : i32, i32
  }
  func.func @transform_8(%arg0: i32) -> (i32, i32) {
    %c0_i32 = arith.constant 0 : i32
    %c0_i32_0 = arith.constant 0 : i32
    %c0_i32_1 = arith.constant 0 : i32
    return %c0_i32, %c0_i32_0 : i32, i32
  }
  func.func @transform_9(%arg0: i32) -> (i32, i32) {
    %c0_i32 = arith.constant 0 : i32
    %c0_i32_0 = arith.constant 0 : i32
    %c0_i32_1 = arith.constant 0 : i32
    return %c0_i32, %c0_i32_0 : i32, i32
  }
  func.func @transform_10(%arg0: i32) -> (i32, i32) {
    %c0_i32 = arith.constant 0 : i32
    %c0_i32_0 = arith.constant 0 : i32
    %c0_i32_1 = arith.constant 0 : i32
    return %c0_i32, %c0_i32_0 : i32, i32
  }
  func.func @transform_11(%arg0: i32) -> (i32, i32) {
    %c0_i32 = arith.constant 0 : i32
    %c0_i32_0 = arith.constant 0 : i32
    %c0_i32_1 = arith.constant 0 : i32
    return %c0_i32, %c0_i32_0 : i32, i32
  }
  func.func @transform_12(%arg0: i32) -> (i32, i32) {
    %c0_i32 = arith.constant 0 : i32
    %c0_i32_0 = arith.constant 0 : i32
    %c0_i32_1 = arith.constant 0 : i32
    return %c0_i32, %c0_i32_0 : i32, i32
  }
  func.func @transform_13(%arg0: i32) -> (i32, i32) {
    %c0_i32 = arith.constant 0 : i32
    %c0_i32_0 = arith.constant 0 : i32
    return %arg0, %c0_i32 : i32, i32
  }
}

</mosaic_0001>

<llo_original>
// kernel: tpu_custom_call.1
$region0: #{tpu_custom_call.1}
  #allocation0 [shape = 'u32[]', space=smem, size = 0x4, offset = 0x4, fixed_abs, tag = 'smem constant byte address 0x4 - core index']
  #allocation1 [shape = 'u32[144,128]{1,0:T(1,128)}', space=vmem, size = 0x12000, scoped, tag = 'internal scratch']
  %s0 = inlined_call_operand.vmem [shape: f32[16,32], index: 0, kind: input, shape index: {}]
  %s1 = inlined_call_operand.vmem [shape: f32[16,8], index: 1, kind: input, shape index: {}]
  %s2 = inlined_call_operand.vmem [shape: f32[8,16], index: 2, kind: input, shape index: {}]
  %s3 = inlined_call_operand.vmem [shape: f32[8,32], index: 3, kind: input, shape index: {}]
  %s4 = inlined_call_operand.vmem [shape: f32[8,32], index: 4, kind: input, shape index: {}]
  %s5 = inlined_call_operand.vmem [shape: f32[1,32], index: 5, kind: input, shape index: {}]
  %s6 = inlined_call_operand.vmem [shape: f32[1,32], index: 6, kind: input, shape index: {}]
  %s7 = inlined_call_operand.vmem [shape: bf16[32,128], index: 7, kind: input, shape index: {}]
  %s8 = inlined_call_operand.vmem [shape: f32[1,128], index: 8, kind: input, shape index: {}]
  %s9 = inlined_call_operand.vmem [shape: bf16[128,32], index: 9, kind: input, shape index: {}]
  %s10 = inlined_call_operand.vmem [shape: f32[1,32], index: 10, kind: input, shape index: {}]
  %s11 = inlined_call_operand.vmem [shape: f32[1,32], index: 11, kind: input, shape index: {}]
  %s12 = inlined_call_operand.vmem [shape: f32[1,32], index: 12, kind: input, shape index: {}]
  %s13 = inlined_call_operand.hbm [shape: f32[16,32], index: 13, kind: output, shape index: {}]
  %s14 = sld [smem:[#allocation0]]
  $region85: #{tpu_custom_call.1} parent=0
    _
  %s16 = ssub.s32 1, %s14
  %s17 = scalar_select 0, %s16, %s14
  $region1: #{tpu_custom_call.1} parent=0
    #allocation2 [shape = 'u8[8192]{0}', space=vmem, size = 0x2000, scoped, tag = 'output window, operand 0']
    #allocation3 [shape = 's32[2]{0}', space=sflag, size = 0x8, scoped, tag = 'scoped memory for tpu_custom_call.1']
    %18 = vsyncpa [#allocation3], 0
    %s19 = scalar_lea.sflag [#allocation3], 1
    %20 = vsyncpa %s19, 0
    loop: start=0, step=1, limit=4
    $region2: #{tpu_custom_call.1} parent=1 // loop_pre_header
      _
    $region3: #{tpu_custom_call.1} parent=1 // loop_header
      %s22 = sphi 0, %s26
      %p23 = scmp.ge.s32.totalorder %s22, 4
      %s32 = sphi 0, %s34
      %s35 = sphi 0, %s32
      %s36 = sphi 0, %s35
      %s52 = sphi 0, %s36
      %s56 = sphi 0, %s56
      %s58 = sphi 0, %s56
      %s59 = sphi 0, %s58
      %s73 = sphi 0, %s59
      %s77 = sphi 0, %s77
      %s79 = sphi 0, %s77
      %s80 = sphi 0, %s79
      %s94 = sphi 0, %s80
      %s98 = sphi 0, %s98
      %s100 = sphi 0, %s98
      %s101 = sphi 0, %s100
      %s115 = sphi 0, %s101
      %s119 = sphi 0, %s119
      %s121 = sphi 0, %s119
      %s122 = sphi 0, %s121
      %s136 = sphi 0, %s122
      %s140 = sphi 0, %s140
      %s142 = sphi 0, %s140
      %s143 = sphi 0, %s142
      %s157 = sphi 0, %s143
      %s161 = sphi 0, %s161
      %s163 = sphi 0, %s161
      %s164 = sphi 0, %s163
      %s178 = sphi 0, %s164
      %s182 = sphi 0, %s182
      %s184 = sphi 0, %s182
      %s185 = sphi 0, %s184
      %s199 = sphi 0, %s185
      %s203 = sphi 0, %s203
      %s205 = sphi 0, %s203
      %s206 = sphi 0, %s205
      %s220 = sphi 0, %s206
      %s224 = sphi 0, %s224
      %s226 = sphi 0, %s224
      %s227 = sphi 0, %s226
      %s241 = sphi 0, %s227
      %s245 = sphi 0, %s245
      %s247 = sphi 0, %s245
      %s248 = sphi 0, %s247
      %s262 = sphi 0, %s248
      %s266 = sphi 0, %s266
      %s268 = sphi 0, %s266
      %s269 = sphi 0, %s268
      %s283 = sphi 0, %s269
      %s287 = sphi 0, %s287
      %s289 = sphi 0, %s287
      %s290 = sphi 0, %s289
      %s304 = sphi 0, %s290
      %s310 = sphi 0, %s312
      %s313 = sphi 0, %s310
      %s314 = sphi 0, %s313
      %s330 = sphi 0, %s314
    $region4: #{tpu_custom_call.1} parent=1 // loop_header_branch
      %25 = sbr.rel (%p23) target = $region8
    $region5: #{tpu_custom_call.1} parent=1 // loop_body
      %s27 = ssub.s32 %s22, 1
      %s28 = ssub.s32 %s22, 2
      %s29 = sadd.s32 %s22, 1
      %s30 = ssub.s32 %s22, %s29
      %p31 = scmp.eq.s32.totalorder %s30, 0
      %s33 = sadd.s32 %s32, 1
      %s34 = scalar_select %p31, %s32, %s33
      %p37 = pneg %p31
      %p38 = scmp.eq.s32.totalorder %s22, 1
      %p39 = por %p37, %p38
      %p40 = scmp.ne.s32.totalorder %s32, %s35
      %p41 = scmp.eq.s32.totalorder %s22, 0
      %p42 = por %p40, %p41
      %p43 = scmp.ne.s32.totalorder %s32, %s35
      %p44 = scmp.eq.s32.totalorder %s27, 1
      %p45 = por %p43, %p44
      %p46 = scmp.ne.s32.totalorder %s35, %s36
      %p47 = scmp.eq.s32.totalorder %s27, 0
      %p48 = por %p46, %p47
      %p49 = scmp.ne.s32.totalorder %s35, %s36
      %p50 = scmp.eq.s32.totalorder %s28, 1
      %p51 = por %p49, %p50
      %p53 = scmp.ne.s32.totalorder %s36, %s52
      %p54 = scmp.eq.s32.totalorder %s28, 0
      %p55 = por %p53, %p54
      %s57 = sadd.s32 %s56, 1
      %p60 = scmp.eq.s32.totalorder %s22, 1
      %p61 = scmp.ne.s32.totalorder %s56, %s58
      %p62 = scmp.eq.s32.totalorder %s22, 0
      %p63 = por %p61, %p62
      %p64 = scmp.ne.s32.totalorder %s56, %s58
      %p65 = scmp.eq.s32.totalorder %s27, 1
      %p66 = por %p64, %p65
      %p67 = scmp.ne.s32.totalorder %s58, %s59
      %p68 = scmp.eq.s32.totalorder %s27, 0
      %p69 = por %p67, %p68
      %p70 = scmp.ne.s32.totalorder %s58, %s59
      %p71 = scmp.eq.s32.totalorder %s28, 1
      %p72 = por %p70, %p71
      %p74 = scmp.ne.s32.totalorder %s59, %s73
      %p75 = scmp.eq.s32.totalorder %s28, 0
      %p76 = por %p74, %p75
      %s78 = sadd.s32 %s77, 1
      %p81 = scmp.eq.s32.totalorder %s22, 1
      %p82 = scmp.ne.s32.totalorder %s77, %s79
      %p83 = scmp.eq.s32.totalorder %s22, 0
      %p84 = por %p82, %p83
      %p85 = scmp.ne.s32.totalorder %s77, %s79
      %p86 = scmp.eq.s32.totalorder %s27, 1
      %p87 = por %p85, %p86
      %p88 = scmp.ne.s32.totalorder %s79, %s80
      %p89 = scmp.eq.s32.totalorder %s27, 0
      %p90 = por %p88, %p89
      %p91 = scmp.ne.s32.totalorder %s79, %s80
      %p92 = scmp.eq.s32.totalorder %s28, 1
      %p93 = por %p91, %p92
      %p95 = scmp.ne.s32.totalorder %s80, %s94
      %p96 = scmp.eq.s32.totalorder %s28, 0
      %p97 = por %p95, %p96
      %s99 = sadd.s32 %s98, 1
      %p102 = scmp.eq.s32.totalorder %s22, 1
      %p103 = scmp.ne.s32.totalorder %s98, %s100
      %p104 = scmp.eq.s32.totalorder %s22, 0
      %p105 = por %p103, %p104
      %p106 = scmp.ne.s32.totalorder %s98, %s100
      %p107 = scmp.eq.s32.totalorder %s27, 1
      %p108 = por %p106, %p107
      %p109 = scmp.ne.s32.totalorder %s100, %s101
      %p110 = scmp.eq.s32.totalorder %s27, 0
      %p111 = por %p109, %p110
      %p112 = scmp.ne.s32.totalorder %s100, %s101
      %p113 = scmp.eq.s32.totalorder %s28, 1
      %p114 = por %p112, %p113
      %p116 = scmp.ne.s32.totalorder %s101, %s115
      %p117 = scmp.eq.s32.totalorder %s28, 0
      %p118 = por %p116, %p117
      %s120 = sadd.s32 %s119, 1
      %p123 = scmp.eq.s32.totalorder %s22, 1
      %p124 = scmp.ne.s32.totalorder %s119, %s121
      %p125 = scmp.eq.s32.totalorder %s22, 0
      %p126 = por %p124, %p125
      %p127 = scmp.ne.s32.totalorder %s119, %s121
      %p128 = scmp.eq.s32.totalorder %s27, 1
      %p129 = por %p127, %p128
      %p130 = scmp.ne.s32.totalorder %s121, %s122
      %p131 = scmp.eq.s32.totalorder %s27, 0
      %p132 = por %p130, %p131
      %p133 = scmp.ne.s32.totalorder %s121, %s122
      %p134 = scmp.eq.s32.totalorder %s28, 1
      %p135 = por %p133, %p134
      %p137 = scmp.ne.s32.totalorder %s122, %s136
      %p138 = scmp.eq.s32.totalorder %s28, 0
      %p139 = por %p137, %p138
      %s141 = sadd.s32 %s140, 1
      %p144 = scmp.eq.s32.totalorder %s22, 1
      %p145 = scmp.ne.s32.totalorder %s140, %s142
      %p146 = scmp.eq.s32.totalorder %s22, 0
      %p147 = por %p145, %p146
      %p148 = scmp.ne.s32.totalorder %s140, %s142
      %p149 = scmp.eq.s32.totalorder %s27, 1
      %p150 = por %p148, %p149
      %p151 = scmp.ne.s32.totalorder %s142, %s143
      %p152 = scmp.eq.s32.totalorder %s27, 0
      %p153 = por %p151, %p152
      %p154 = scmp.ne.s32.totalorder %s142, %s143
      %p155 = scmp.eq.s32.totalorder %s28, 1
      %p156 = por %p154, %p155
      %p158 = scmp.ne.s32.totalorder %s143, %s157
      %p159 = scmp.eq.s32.totalorder %s28, 0
      %p160 = por %p158, %p159
      %s162 = sadd.s32 %s161, 1
      %p165 = scmp.eq.s32.totalorder %s22, 1
      %p166 = scmp.ne.s32.totalorder %s161, %s163
      %p167 = scmp.eq.s32.totalorder %s22, 0
      %p168 = por %p166, %p167
      %p169 = scmp.ne.s32.totalorder %s161, %s163
      %p170 = scmp.eq.s32.totalorder %s27, 1
      %p171 = por %p169, %p170
      %p172 = scmp.ne.s32.totalorder %s163, %s164
      %p173 = scmp.eq.s32.totalorder %s27, 0
      %p174 = por %p172, %p173
      %p175 = scmp.ne.s32.totalorder %s163, %s164
      %p176 = scmp.eq.s32.totalorder %s28, 1
      %p177 = por %p175, %p176
      %p179 = scmp.ne.s32.totalorder %s164, %s178
      %p180 = scmp.eq.s32.totalorder %s28, 0
      %p181 = por %p179, %p180
      %s183 = sadd.s32 %s182, 1
      %p186 = scmp.eq.s32.totalorder %s22, 1
      %p187 = scmp.ne.s32.totalorder %s182, %s184
      %p188 = scmp.eq.s32.totalorder %s22, 0
      %p189 = por %p187, %p188
      %p190 = scmp.ne.s32.totalorder %s182, %s184
      %p191 = scmp.eq.s32.totalorder %s27, 1
      %p192 = por %p190, %p191
      %p193 = scmp.ne.s32.totalorder %s184, %s185
      %p194 = scmp.eq.s32.totalorder %s27, 0
      %p195 = por %p193, %p194
      %p196 = scmp.ne.s32.totalorder %s184, %s185
      %p197 = scmp.eq.s32.totalorder %s28, 1
      %p198 = por %p196, %p197
      %p200 = scmp.ne.s32.totalorder %s185, %s199
      %p201 = scmp.eq.s32.totalorder %s28, 0
      %p202 = por %p200, %p201
      %s204 = sadd.s32 %s203, 1
      %p207 = scmp.eq.s32.totalorder %s22, 1
      %p208 = scmp.ne.s32.totalorder %s203, %s205
      %p209 = scmp.eq.s32.totalorder %s22, 0
      %p210 = por %p208, %p209
      %p211 = scmp.ne.s32.totalorder %s203, %s205
      %p212 = scmp.eq.s32.totalorder %s27, 1
      %p213 = por %p211, %p212
      %p214 = scmp.ne.s32.totalorder %s205, %s206
      %p215 = scmp.eq.s32.totalorder %s27, 0
      %p216 = por %p214, %p215
      %p217 = scmp.ne.s32.totalorder %s205, %s206
      %p218 = scmp.eq.s32.totalorder %s28, 1
      %p219 = por %p217, %p218
      %p221 = scmp.ne.s32.totalorder %s206, %s220
      %p222 = scmp.eq.s32.totalorder %s28, 0
      %p223 = por %p221, %p222
      %s225 = sadd.s32 %s224, 1
      %p228 = scmp.eq.s32.totalorder %s22, 1
      %p229 = scmp.ne.s32.totalorder %s224, %s226
      %p230 = scmp.eq.s32.totalorder %s22, 0
      %p231 = por %p229, %p230
      %p232 = scmp.ne.s32.totalorder %s224, %s226
      %p233 = scmp.eq.s32.totalorder %s27, 1
      %p234 = por %p232, %p233
      %p235 = scmp.ne.s32.totalorder %s226, %s227
      %p236 = scmp.eq.s32.totalorder %s27, 0
      %p237 = por %p235, %p236
      %p238 = scmp.ne.s32.totalorder %s226, %s227
      %p239 = scmp.eq.s32.totalorder %s28, 1
      %p240 = por %p238, %p239
      %p242 = scmp.ne.s32.totalorder %s227, %s241
      %p243 = scmp.eq.s32.totalorder %s28, 0
      %p244 = por %p242, %p243
      %s246 = sadd.s32 %s245, 1
      %p249 = scmp.eq.s32.totalorder %s22, 1
      %p250 = scmp.ne.s32.totalorder %s245, %s247
      %p251 = scmp.eq.s32.totalorder %s22, 0
      %p252 = por %p250, %p251
      %p253 = scmp.ne.s32.totalorder %s245, %s247
      %p254 = scmp.eq.s32.totalorder %s27, 1
      %p255 = por %p253, %p254
      %p256 = scmp.ne.s32.totalorder %s247, %s248
      %p257 = scmp.eq.s32.totalorder %s27, 0
      %p258 = por %p256, %p257
      %p259 = scmp.ne.s32.totalorder %s247, %s248
      %p260 = scmp.eq.s32.totalorder %s28, 1
      %p261 = por %p259, %p260
      %p263 = scmp.ne.s32.totalorder %s248, %s262
      %p264 = scmp.eq.s32.totalorder %s28, 0
      %p265 = por %p263, %p264
      %s267 = sadd.s32 %s266, 1
      %p270 = scmp.eq.s32.totalorder %s22, 1
      %p271 = scmp.ne.s32.totalorder %s266, %s268
      %p272 = scmp.eq.s32.totalorder %s22, 0
      %p273 = por %p271, %p272
      %p274 = scmp.ne.s32.totalorder %s266, %s268
      %p275 = scmp.eq.s32.totalorder %s27, 1
      %p276 = por %p274, %p275
      %p277 = scmp.ne.s32.totalorder %s268, %s269
      %p278 = scmp.eq.s32.totalorder %s27, 0
      %p279 = por %p277, %p278
      %p280 = scmp.ne.s32.totalorder %s268, %s269
      %p281 = scmp.eq.s32.totalorder %s28, 1
      %p282 = por %p280, %p281
      %p284 = scmp.ne.s32.totalorder %s269, %s283
      %p285 = scmp.eq.s32.totalorder %s28, 0
      %p286 = por %p284, %p285
      %s288 = sadd.s32 %s287, 1
      %p291 = scmp.eq.s32.totalorder %s22, 1
      %p292 = scmp.ne.s32.totalorder %s287, %s289
      %p293 = scmp.eq.s32.totalorder %s22, 0
      %p294 = por %p292, %p293
      %p295 = scmp.ne.s32.totalorder %s287, %s289
      %p296 = scmp.eq.s32.totalorder %s27, 1
      %p297 = por %p295, %p296
      %p298 = scmp.ne.s32.totalorder %s289, %s290
      %p299 = scmp.eq.s32.totalorder %s27, 0
      %p300 = por %p298, %p299
      %p301 = scmp.ne.s32.totalorder %s289, %s290
      %p302 = scmp.eq.s32.totalorder %s28, 1
      %p303 = por %p301, %p302
      %p305 = scmp.ne.s32.totalorder %s290, %s304
      %p306 = scmp.eq.s32.totalorder %s28, 0
      %p307 = por %p305, %p306
      %s308 = ssub.s32 %s22, %s29
      %p309 = scmp.eq.s32.totalorder %s308, 0
      %s311 = sadd.s32 %s310, 1
      %s312 = scalar_select %p309, %s310, %s311
      %p315 = pneg %p309
      %p316 = scmp.eq.s32.totalorder %s22, 1
      %p317 = por %p315, %p316
      %p318 = scmp.ne.s32.totalorder %s310, %s313
      %p319 = scmp.eq.s32.totalorder %s22, 0
      %p320 = por %p318, %p319
      %p321 = scmp.ne.s32.totalorder %s310, %s313
      %p322 = scmp.eq.s32.totalorder %s27, 1
      %p323 = por %p321, %p322
      %p324 = scmp.ne.s32.totalorder %s313, %s314
      %p325 = scmp.eq.s32.totalorder %s27, 0
      %p326 = por %p324, %p325
      %p327 = scmp.ne.s32.totalorder %s313, %s314
      %p328 = scmp.eq.s32.totalorder %s28, 1
      %p329 = por %p327, %p328
      %p331 = scmp.ne.s32.totalorder %s314, %s330
      %p332 = scmp.eq.s32.totalorder %s28, 0
      %p333 = por %p331, %p332
      %p334 = scmp.le.s32.totalorder 1, %s22
      %p335 = scmp.lt.s32.totalorder %s22, 3
      %p336 = pnand %p334, %p335
      %p337 = pneg %p336
      // Predicated region
      $region9: #{tpu_custom_call.1} parent=5 // pred_check
        _
      $region10: #{tpu_custom_call.1} parent=5 // pred_check_branch
        %339 = sbr.rel (%p336) target = $region12
      $region11: #{tpu_custom_call.1} parent=5 // pred_region
        %s340 = ssub.s32 %s22, 1
        // Predicated region
        $region13: #{tpu_custom_call.1} parent=11 // pred_check
          %p341 = pneg %p69
        $region14: #{tpu_custom_call.1} parent=11 // pred_check_branch
          %343 = sbr.rel (%p341) target = $region16
        $region15: #{tpu_custom_call.1} parent=11 // pred_region
          _
        $region16: #{tpu_custom_call.1} parent=11 // pred_fallthru
          _
        // Predicated region
        $region17: #{tpu_custom_call.1} parent=11 // pred_check
          %p344 = pneg %p90
        $region18: #{tpu_custom_call.1} parent=11 // pred_check_branch
          %346 = sbr.rel (%p344) target = $region20
        $region19: #{tpu_custom_call.1} parent=11 // pred_region
          _
        $region20: #{tpu_custom_call.1} parent=11 // pred_fallthru
          _
        // Predicated region
        $region21: #{tpu_custom_call.1} parent=11 // pred_check
          %p347 = pneg %p111
        $region22: #{tpu_custom_call.1} parent=11 // pred_check_branch
          %349 = sbr.rel (%p347) target = $region24
        $region23: #{tpu_custom_call.1} parent=11 // pred_region
          _
        $region24: #{tpu_custom_call.1} parent=11 // pred_fallthru
          _
        // Predicated region
        $region25: #{tpu_custom_call.1} parent=11 // pred_check
          %p350 = pneg %p132
        $region26: #{tpu_custom_call.1} parent=11 // pred_check_branch
          %352 = sbr.rel (%p350) target = $region28
        $region27: #{tpu_custom_call.1} parent=11 // pred_region
          _
        $region28: #{tpu_custom_call.1} parent=11 // pred_fallthru
          _
        // Predicated region
        $region29: #{tpu_custom_call.1} parent=11 // pred_check
          %p353 = pneg %p153
        $region30: #{tpu_custom_call.1} parent=11 // pred_check_branch
          %355 = sbr.rel (%p353) target = $region32
        $region31: #{tpu_custom_call.1} parent=11 // pred_region
          _
        $region32: #{tpu_custom_call.1} parent=11 // pred_fallthru
          _
        // Predicated region
        $region33: #{tpu_custom_call.1} parent=11 // pred_check
          %p356 = pneg %p174
        $region34: #{tpu_custom_call.1} parent=11 // pred_check_branch
          %358 = sbr.rel (%p356) target = $region36
        $region35: #{tpu_custom_call.1} parent=11 // pred_region
          _
        $region36: #{tpu_custom_call.1} parent=11 // pred_fallthru
          _
        // Predicated region
        $region37: #{tpu_custom_call.1} parent=11 // pred_check
          %p359 = pneg %p195
        $region38: #{tpu_custom_call.1} parent=11 // pred_check_branch
          %361 = sbr.rel (%p359) target = $region40
        $region39: #{tpu_custom_call.1} parent=11 // pred_region
          _
        $region40: #{tpu_custom_call.1} parent=11 // pred_fallthru
          _
        // Predicated region
        $region41: #{tpu_custom_call.1} parent=11 // pred_check
          %p362 = pneg %p216
        $region42: #{tpu_custom_call.1} parent=11 // pred_check_branch
          %364 = sbr.rel (%p362) target = $region44
        $region43: #{tpu_custom_call.1} parent=11 // pred_region
          _
        $region44: #{tpu_custom_call.1} parent=11 // pred_fallthru
          _
        // Predicated region
        $region45: #{tpu_custom_call.1} parent=11 // pred_check
          %p365 = pneg %p237
        $region46: #{tpu_custom_call.1} parent=11 // pred_check_branch
          %367 = sbr.rel (%p365) target = $region48
        $region47: #{tpu_custom_call.1} parent=11 // pred_region
          _
        $region48: #{tpu_custom_call.1} parent=11 // pred_fallthru
          _
        // Predicated region
        $region49: #{tpu_custom_call.1} parent=11 // pred_check
          %p368 = pneg %p258
        $region50: #{tpu_custom_call.1} parent=11 // pred_check_branch
          %370 = sbr.rel (%p368) target = $region52
        $region51: #{tpu_custom_call.1} parent=11 // pred_region
          _
        $region52: #{tpu_custom_call.1} parent=11 // pred_fallthru
          _
        // Predicated region
        $region53: #{tpu_custom_call.1} parent=11 // pred_check
          %p371 = pneg %p279
        $region54: #{tpu_custom_call.1} parent=11 // pred_check_branch
          %373 = sbr.rel (%p371) target = $region56
        $region55: #{tpu_custom_call.1} parent=11 // pred_region
          _
        $region56: #{tpu_custom_call.1} parent=11 // pred_fallthru
          _
        // Predicated region
        $region57: #{tpu_custom_call.1} parent=11 // pred_check
          %p374 = pneg %p300
        $region58: #{tpu_custom_call.1} parent=11 // pred_check_branch
          %376 = sbr.rel (%p374) target = $region60
        $region59: #{tpu_custom_call.1} parent=11 // pred_region
          _
        $region60: #{tpu_custom_call.1} parent=11 // pred_fallthru
          _
      $region12: #{tpu_custom_call.1} parent=5 // pred_fallthru
        _
      %p377 = scmp.lt.s32.totalorder %s22, 2
      // Predicated region
      $region61: #{tpu_custom_call.1} parent=5 // pred_check
        %p378 = pneg %p377
      $region62: #{tpu_custom_call.1} parent=5 // pred_check_branch
        %380 = sbr.rel (%p378) target = $region64
      $region63: #{tpu_custom_call.1} parent=5 // pred_region
        // Predicated region
        $region65: #{tpu_custom_call.1} parent=63 // pred_check
          %p381 = pneg %p42
        $region66: #{tpu_custom_call.1} parent=63 // pred_check_branch
          %383 = sbr.rel (%p381) target = $region68
        $region67: #{tpu_custom_call.1} parent=63 // pred_region
          %p384 = scmp.lt.s32.totalorder %s22, 1
          %s385 = scalar_select %p384, %s22, 1
          %s386 = smul.addr %s385, 8
          %s387 = scalar_lea.vmem %s0, %s386
        $region68: #{tpu_custom_call.1} parent=63 // pred_fallthru
          _
      $region64: #{tpu_custom_call.1} parent=5 // pred_fallthru
        _
      %p388 = scmp.le.s32.totalorder 1, %s22
      %p389 = scmp.lt.s32.totalorder %s22, 3
      %p390 = pnand %p388, %p389
      %p391 = pneg %p390
      // Predicated region
      $region69: #{tpu_custom_call.1} parent=5 // pred_check
        _
      $region70: #{tpu_custom_call.1} parent=5 // pred_check_branch
        %393 = sbr.rel (%p390) target = $region72
      $region71: #{tpu_custom_call.1} parent=5 // pred_region
        %s394 = ssub.s32 %s22, 1
        %p395 = scmp.lt.s32.totalorder %s27, 1
        %s396 = scalar_select %p395, %s27, 1
        %s397 = smul.addr %s396, 8
        %s398 = scalar_lea.vmem %s0, %s397
        %p399 = pneg %p48
        %p400 = pneg %p45
        %p401 = pneg %p69
        %p402 = pneg %p66
        %p403 = pneg %p90
        %p404 = pneg %p87
        %p405 = pneg %p111
        %p406 = pneg %p108
        %p407 = pneg %p132
        %p408 = pneg %p129
        %p409 = pneg %p153
        %p410 = pneg %p150
        %p411 = pneg %p174
        %p412 = pneg %p171
        %p413 = pneg %p195
        %p414 = pneg %p192
        %p415 = pneg %p216
        %p416 = pneg %p213
        %p417 = pneg %p237
        %p418 = pneg %p234
        %p419 = pneg %p258
        %p420 = pneg %p255
        %p421 = pneg %p279
        %p422 = pneg %p276
        %p423 = pneg %p300
        %p424 = pneg %p297
        %p425 = pneg %p326
        %p426 = pneg %p323
        %s427 = sand.u32 %s313, 1
        %s428 = scalar_lea.sflag [#allocation3], %s427
        %s429 = sand.u32 %s313, 1
        %s430 = smul.addr %s429, 8
        %s431 = scalar_lea.vmem [#allocation2], %s430
        %p432 = scmp.lt.s32.totalorder %s27, 1
        %s433 = scalar_select %p432, %s27, 1
        %s434 = smul.addr %s433, 8
        %s435 = scalar_lea.vmem %s0, %s434
        %v437 = vld [vmem:[%s435] sm:$0xff]
        %v438 = vld [vmem:[%s1] sm:$0xff]
        %v439 = vld [vmem:[%s1 + $0x8] sm:$0xff]
        %v440 = vld [vmem:[%s2] sm:$0xff]
        %v441 = vld [vmem:[%s3] sm:$0xff]
        %v442 = vld [vmem:[%s4] sm:$0xff]
        %vm443 = vcmask 64512
        %v445 = vsel %vm443, %v438, 0
        %v448 = vsel %vm443, %v439, 0
        %450 = vmatprep.subr.mxu0 0.0
        %451 = vmatpush1.msra.mxu0 %v437
        %452 = vmatprep.subr.mxu0 0.0
        %453 = vmatpush1.msra.mxu0 0.0
        %454 = vmatprep.subr.mxu0 0.0
        %455 = vmatpush1.msra.mxu0 0.0
        %456 = vmatprep.subr.mxu0 0.0
        %457 = vmatpush1.msra.mxu0 0.0
        %458 = vmatprep.subr.mxu0 0.0
        %459 = vmatpush1.msra.mxu0 0.0
        %460 = vmatprep.subr.mxu0 0.0
        %461 = vmatpush1.msra.mxu0 0.0
        %462 = vmatprep.subr.mxu0 0.0
        %463 = vmatpush1.msra.mxu0 0.0
        %464 = vmatprep.subr.mxu0 0.0
        %465 = vmatpush1.msra.mxu0 0.0
        %466 = vmatprep.subr.mxu0 0.0
        %467 = vmatpush1.msra.mxu0 0.0
        %468 = vmatprep.subr.mxu0 0.0
        %469 = vmatpush1.msra.mxu0 0.0
        %470 = vmatprep.subr.mxu0 0.0
        %471 = vmatpush1.msra.mxu0 0.0
        %472 = vmatprep.subr.mxu0 0.0
        %473 = vmatpush1.msra.mxu0 0.0
        %474 = vmatprep.subr.mxu0 0.0
        %475 = vmatpush1.msra.mxu0 0.0
        %476 = vmatprep.subr.mxu0 0.0
        %477 = vmatpush1.msra.mxu0 0.0
        %478 = vmatprep.subr.mxu0 0.0
        %479 = vmatpush1.msra.mxu0 0.0
        %480 = vmatprep.subr.mxu0 0.0
        %481 = vmatpush1.msra.mxu0 0.0
        %482 = vmatprep.subr.mxu0 0.0
        %483 = vmatpush1.msra.mxu0 0.0
        %484 = vmatprep.subr.mxu0 0.0
        %485 = vmatpush1.msra.mxu0 0.0
        %486 = vmatprep.subr.mxu0 0.0
        %487 = vmatpush1.msra.mxu0 0.0
        %488 = vmatprep.subr.mxu0 0.0
        %489 = vmatpush1.msra.mxu0 0.0
        %490 = vmatprep.subr.mxu0 0.0
        %491 = vmatpush1.msra.mxu0 0.0
        %492 = vmatprep.subr.mxu0 0.0
        %493 = vmatpush1.msra.mxu0 0.0
        %494 = vmatprep.subr.mxu0 0.0
        %495 = vmatpush1.msra.mxu0 0.0
        %496 = vmatprep.subr.mxu0 0.0
        %497 = vmatpush1.msra.mxu0 0.0
        %498 = vmatprep.subr.mxu0 0.0
        %499 = vmatpush1.msra.mxu0 0.0
        %500 = vmatprep.subr.mxu0 0.0
        %501 = vmatpush1.msra.mxu0 0.0
        %502 = vmatprep.subr.mxu0 0.0
        %503 = vmatpush1.msra.mxu0 0.0
        %504 = vmatprep.subr.mxu0 0.0
        %505 = vmatpush1.msra.mxu0 0.0
        %506 = vmatprep.subr.mxu0 0.0
        %507 = vmatpush1.msra.mxu0 0.0
        %508 = vmatprep.subr.mxu0 0.0
        %509 = vmatpush1.msra.mxu0 0.0
        %510 = vmatprep.subr.mxu0 0.0
        %511 = vmatpush1.msra.mxu0 0.0
        %512 = vmatprep.subr.mxu0 0.0
        %513 = vmatpush1.msra.mxu0 0.0
        %514 = vmatprep.mubr.f32.mxu0 0.0
        %515 = vmatmul.mubr.f32.gmra.mrb[0].mxu0 %v445
        %v516 = vpop.f32.mrb[0].mxu0
        %v517 = vadd.f32 0.0, %v516
        %v518 = vpop.f32.mrb[0].mxu0
        %519 = vmatprep.mubr.f32.mxu0 0.0
        %520 = vmatmul.mubr.f32.gmra.mrb[0].mxu0 %v448
        %v521 = vpop.f32.mrb[0].mxu0
        %v522 = vadd.f32 0.0, %v521
        %v523 = vpop.f32.mrb[0].mxu0
        %524 = vdwg.mxu0
        %v525 = vmul.f32 %v517, %v441
        %v526 = vmul.f32 %v522, %v442
        %v527 = vsub.f32 %v525, %v526
        %v528 = vmul.f32 %v517, %v442
        %v529 = vmul.f32 %v522, %v441
        %v530 = vadd.f32 %v528, %v529
        %vm531 = vcmask 130048
        %v533 = vsel %vm531, %v440, 0
        %535 = vmatprep.subr.mxu0 0.0
        %536 = vmatpush1.msra.mxu0 %v527
        %537 = vmatprep.subr.mxu0 0.0
        %538 = vmatpush1.msra.mxu0 %v530
        %539 = vmatprep.subr.mxu0 0.0
        %540 = vmatpush1.msra.mxu0 0.0
        %541 = vmatprep.subr.mxu0 0.0
        %542 = vmatpush1.msra.mxu0 0.0
        %543 = vmatprep.subr.mxu0 0.0
        %544 = vmatpush1.msra.mxu0 0.0
        %545 = vmatprep.subr.mxu0 0.0
        %546 = vmatpush1.msra.mxu0 0.0
        %547 = vmatprep.subr.mxu0 0.0
        %548 = vmatpush1.msra.mxu0 0.0
        %549 = vmatprep.subr.mxu0 0.0
        %550 = vmatpush1.msra.mxu0 0.0
        %551 = vmatprep.subr.mxu0 0.0
        %552 = vmatpush1.msra.mxu0 0.0
        %553 = vmatprep.subr.mxu0 0.0
        %554 = vmatpush1.msra.mxu0 0.0
        %555 = vmatprep.subr.mxu0 0.0
        %556 = vmatpush1.msra.mxu0 0.0
        %557 = vmatprep.subr.mxu0 0.0
        %558 = vmatpush1.msra.mxu0 0.0
        %559 = vmatprep.subr.mxu0 0.0
        %560 = vmatpush1.msra.mxu0 0.0
        %561 = vmatprep.subr.mxu0 0.0
        %562 = vmatpush1.msra.mxu0 0.0
        %563 = vmatprep.subr.mxu0 0.0
        %564 = vmatpush1.msra.mxu0 0.0
        %565 = vmatprep.subr.mxu0 0.0
        %566 = vmatpush1.msra.mxu0 0.0
        %567 = vmatprep.subr.mxu0 0.0
        %568 = vmatpush1.msra.mxu0 0.0
        %569 = vmatprep.subr.mxu0 0.0
        %570 = vmatpush1.msra.mxu0 0.0
        %571 = vmatprep.subr.mxu0 0.0
        %572 = vmatpush1.msra.mxu0 0.0
        %573 = vmatprep.subr.mxu0 0.0
        %574 = vmatpush1.msra.mxu0 0.0
        %575 = vmatprep.subr.mxu0 0.0
        %576 = vmatpush1.msra.mxu0 0.0
        %577 = vmatprep.subr.mxu0 0.0
        %578 = vmatpush1.msra.mxu0 0.0
        %579 = vmatprep.subr.mxu0 0.0
        %580 = vmatpush1.msra.mxu0 0.0
        %581 = vmatprep.subr.mxu0 0.0
        %582 = vmatpush1.msra.mxu0 0.0
        %583 = vmatprep.subr.mxu0 0.0
        %584 = vmatpush1.msra.mxu0 0.0
        %585 = vmatprep.subr.mxu0 0.0
        %586 = vmatpush1.msra.mxu0 0.0
        %587 = vmatprep.subr.mxu0 0.0
        %588 = vmatpush1.msra.mxu0 0.0
        %589 = vmatprep.subr.mxu0 0.0
        %590 = vmatpush1.msra.mxu0 0.0
        %591 = vmatprep.subr.mxu0 0.0
        %592 = vmatpush1.msra.mxu0 0.0
        %593 = vmatprep.subr.mxu0 0.0
        %594 = vmatpush1.msra.mxu0 0.0
        %595 = vmatprep.subr.mxu0 0.0
        %596 = vmatpush1.msra.mxu0 0.0
        %597 = vmatprep.subr.mxu0 0.0
        %598 = vmatpush1.msra.mxu0 0.0
        %599 = vmatprep.mubr.f32.mxu0 0.0
        %600 = vmatmul.mubr.f32.gmra.mrb[0].mxu0 %v533
        %v601 = vpop.f32.mrb[0].mxu0
        %v602 = vadd.f32 %v437, %v601
        %v603 = vpop.f32.mrb[0].mxu0
        %604 = vdwg.mxu0
        %vm605 = vcmask 261120
        %v606 = vsel %vm605, %v602, 0.0
        %607 = vadd.xlane.f32.xlu0 %v606
        %v608 = vpop.xlane.xlu0 %607
        %v609 = vrcp.pop 32.0
        %v610 = vmul.f32 %v608, %v609
        %v611 = vsub.f32 %v602, %v610
        %v612 = vmul.f32 %v611, %v611
        %v613 = vsel %vm605, %v612, 0.0
        %614 = vadd.xlane.f32.xlu0 %v613
        %v615 = vpop.xlane.xlu0 %614
        %v616 = vmul.f32 %v615, %v609
        %v617 = vadd.f32 %v616, 1e-12
        %v618 = vrsqrt.pop %v617
        %v619 = vmul.f32 %v611, %v618
        %v620 = vld [vmem:[%s5] sm:$0x1]
        %v622 = vlaneseq
        %v623 = vshrl.u32 %v622, 7
        %v624 = vsub.s32 0, %v623
        %v625 = vrot.slane %v620, %v624
        %v627 = vmul.f32 %v619, %v625
        %v628 = vld [vmem:[%s6] sm:$0x1]
        %v630 = vlaneseq
        %v631 = vshrl.u32 %v630, 7
        %v632 = vsub.s32 0, %v631
        %v633 = vrot.slane %v628, %v632
        %v635 = vadd.f32 %v627, %v633
        %v636 = vpack.c.bf16 %v635, %v635
        %v637 = vld [vmem:[%s7] sm:$0xf]
        %v638 = vld [vmem:[%s7 + $0x4] sm:$0xf]
        %v639 = vld [vmem:[%s7 + $0x8] sm:$0xf]
        %v640 = vld [vmem:[%s7 + $0xc] sm:$0xf]
        %v641 = vld [vmem:[%s8] sm:$0x1]
        %v643 = vlaneseq
        %v644 = vshrl.u32 %v643, 7
        %v645 = vsub.s32 0, %v644
        %v646 = vrot.slane %v641, %v645
        %v652 = vunpack.c.l.b16 %v637
        %v653 = vunpack.c.l.b16 %v638
        %v654 = vunpack.c.l.b16 %v639
        %v655 = vunpack.c.l.b16 %v640
        %v656 = vpack.c.b16 %v653, %v652
        %v657 = vpack.c.b16 %v655, %v654
        %v661 = vsel %vm605, %v636, 0
        %663 = vmatprep.subr.bf16.mxu0 0
        %664 = vmatpush1.bf16.msra.mxu0 %v656
        %665 = vmatprep.subr.bf16.mxu0 0
        %666 = vmatpush1.bf16.msra.mxu0 %v657
        %667 = vmatprep.subr.bf16.mxu0 0
        %668 = vmatpush1.bf16.msra.mxu0 0
        %669 = vmatprep.subr.bf16.mxu0 0
        %670 = vmatpush1.bf16.msra.mxu0 0
        %671 = vmatprep.subr.bf16.mxu0 0
        %672 = vmatpush1.bf16.msra.mxu0 0
        %673 = vmatprep.subr.bf16.mxu0 0
        %674 = vmatpush1.bf16.msra.mxu0 0
        %675 = vmatprep.subr.bf16.mxu0 0
        %676 = vmatpush1.bf16.msra.mxu0 0
        %677 = vmatprep.subr.bf16.mxu0 0
        %678 = vmatpush1.bf16.msra.mxu0 0
        %679 = vmatprep.subr.bf16.mxu0 0
        %680 = vmatpush1.bf16.msra.mxu0 0
        %681 = vmatprep.subr.bf16.mxu0 0
        %682 = vmatpush1.bf16.msra.mxu0 0
        %683 = vmatprep.subr.bf16.mxu0 0
        %684 = vmatpush1.bf16.msra.mxu0 0
        %685 = vmatprep.subr.bf16.mxu0 0
        %686 = vmatpush1.bf16.msra.mxu0 0
        %687 = vmatprep.subr.bf16.mxu0 0
        %688 = vmatpush1.bf16.msra.mxu0 0
        %689 = vmatprep.subr.bf16.mxu0 0
        %690 = vmatpush1.bf16.msra.mxu0 0
        %691 = vmatprep.subr.bf16.mxu0 0
        %692 = vmatpush1.bf16.msra.mxu0 0
        %693 = vmatprep.subr.bf16.mxu0 0
        %694 = vmatpush1.bf16.msra.mxu0 0
        %695 = vmatprep.mubr.bf16.mxu0 0
        %696 = vmatmul.mubr.bf16.gmra.mrb[0].mxu0 %v661
        %v697 = vpop.f32.mrb[0].mxu0
        %v698 = vadd.f32 %v646, %v697
        %v699 = vpop.f32.mrb[0].mxu0
        %v700 = vpop.f32.mrb[0].mxu0
        %v701 = vpop.f32.mrb[0].mxu0
        %702 = vdwg.mxu0
        %v703 = vmul.f32 %v698, 0.5
        %v704 = vmul.f32 %v698, 0.044715
        %v705 = vmul.f32 %v704, %v698
        %v706 = vmul.f32 %v705, %v698
        %v707 = vadd.f32 %v698, %v706
        %v708 = vmul.f32 %v707, 0.7978846
        %v709 = vtanh.pop %v708
        %v710 = vadd.f32 %v709, 1.0
        %v711 = vmul.f32 %v703, %v710
        %v712 = vpack.c.bf16 %v711, %v711
        %v713 = vld [vmem:[%s9] sm:$0xf]
        %v714 = vld [vmem:[%s9 + $0x4] sm:$0xf]
        %v715 = vld [vmem:[%s9 + $0x8] sm:$0xf]
        %v716 = vld [vmem:[%s9 + $0xc] sm:$0xf]
        %v717 = vld [vmem:[%s9 + $0x10] sm:$0xf]
        %v718 = vld [vmem:[%s9 + $0x14] sm:$0xf]
        %v719 = vld [vmem:[%s9 + $0x18] sm:$0xf]
        %v720 = vld [vmem:[%s9 + $0x1c] sm:$0xf]
        %v721 = vld [vmem:[%s9 + $0x20] sm:$0xf]
        %v722 = vld [vmem:[%s9 + $0x24] sm:$0xf]
        %v723 = vld [vmem:[%s9 + $0x28] sm:$0xf]
        %v724 = vld [vmem:[%s9 + $0x2c] sm:$0xf]
        %v725 = vld [vmem:[%s9 + $0x30] sm:$0xf]
        %v726 = vld [vmem:[%s9 + $0x34] sm:$0xf]
        %v727 = vld [vmem:[%s9 + $0x38] sm:$0xf]
        %v728 = vld [vmem:[%s9 + $0x3c] sm:$0xf]
        %v729 = vld [vmem:[%s10] sm:$0x1]
        %v731 = vlaneseq
        %v732 = vshrl.u32 %v731, 7
        %v733 = vsub.s32 0, %v732
        %v734 = vrot.slane %v729, %v733
        %v752 = vunpack.c.l.b16 %v713
        %v753 = vunpack.c.l.b16 %v714
        %v754 = vunpack.c.l.b16 %v715
        %v755 = vunpack.c.l.b16 %v716
        %v756 = vunpack.c.l.b16 %v717
        %v757 = vunpack.c.l.b16 %v718
        %v758 = vunpack.c.l.b16 %v719
        %v759 = vunpack.c.l.b16 %v720
        %v760 = vunpack.c.l.b16 %v721
        %v761 = vunpack.c.l.b16 %v722
        %v762 = vunpack.c.l.b16 %v723
        %v763 = vunpack.c.l.b16 %v724
        %v764 = vunpack.c.l.b16 %v725
        %v765 = vunpack.c.l.b16 %v726
        %v766 = vunpack.c.l.b16 %v727
        %v767 = vunpack.c.l.b16 %v728
        %v768 = vpack.c.b16 %v753, %v752
        %v769 = vpack.c.b16 %v755, %v754
        %v770 = vpack.c.b16 %v757, %v756
        %v771 = vpack.c.b16 %v759, %v758
        %v772 = vpack.c.b16 %v761, %v760
        %v773 = vpack.c.b16 %v763, %v762
        %v774 = vpack.c.b16 %v765, %v764
        %v775 = vpack.c.b16 %v767, %v766
        %784 = vmatprep.subr.bf16.mxu0 0
        %785 = vmatpush1.bf16.msra.mxu0 %v768
        %786 = vmatprep.subr.bf16.mxu0 0
        %787 = vmatpush1.bf16.msra.mxu0 %v769
        %788 = vmatprep.subr.bf16.mxu0 0
        %789 = vmatpush1.bf16.msra.mxu0 %v770
        %790 = vmatprep.subr.bf16.mxu0 0
        %791 = vmatpush1.bf16.msra.mxu0 %v771
        %792 = vmatprep.subr.bf16.mxu0 0
        %793 = vmatpush1.bf16.msra.mxu0 %v772
        %794 = vmatprep.subr.bf16.mxu0 0
        %795 = vmatpush1.bf16.msra.mxu0 %v773
        %796 = vmatprep.subr.bf16.mxu0 0
        %797 = vmatpush1.bf16.msra.mxu0 %v774
        %798 = vmatprep.subr.bf16.mxu0 0
        %799 = vmatpush1.bf16.msra.mxu0 %v775
        %800 = vmatprep.subr.bf16.mxu0 0
        %801 = vmatpush1.bf16.msra.mxu0 0
        %802 = vmatprep.subr.bf16.mxu0 0
        %803 = vmatpush1.bf16.msra.mxu0 0
        %804 = vmatprep.subr.bf16.mxu0 0
        %805 = vmatpush1.bf16.msra.mxu0 0
        %806 = vmatprep.subr.bf16.mxu0 0
        %807 = vmatpush1.bf16.msra.mxu0 0
        %808 = vmatprep.subr.bf16.mxu0 0
        %809 = vmatpush1.bf16.msra.mxu0 0
        %810 = vmatprep.subr.bf16.mxu0 0
        %811 = vmatpush1.bf16.msra.mxu0 0
        %812 = vmatprep.subr.bf16.mxu0 0
        %813 = vmatpush1.bf16.msra.mxu0 0
        %814 = vmatprep.subr.bf16.mxu0 0
        %815 = vmatpush1.bf16.msra.mxu0 0
        %816 = vmatprep.mubr.bf16.mxu0 0
        %817 = vmatmul.mubr.bf16.gmra.mrb[0].mxu0 %v712
        %v818 = vpop.f32.mrb[0].mxu0
        %v819 = vadd.f32 %v734, %v818
        %v820 = vpop.f32.mrb[0].mxu0
        %v821 = vpop.f32.mrb[0].mxu0
        %v822 = vpop.f32.mrb[0].mxu0
        %823 = vdwg.mxu0
        %v824 = vadd.f32 %v819, %v635
        %v825 = vsel %vm605, %v824, 0.0
        %826 = vadd.xlane.f32.xlu0 %v825
        %v827 = vpop.xlane.xlu0 %826
        %v828 = vmul.f32 %v827, %v609
        %v829 = vsub.f32 %v824, %v828
        %v830 = vmul.f32 %v829, %v829
        %v831 = vsel %vm605, %v830, 0.0
        %832 = vadd.xlane.f32.xlu0 %v831
        %v833 = vpop.xlane.xlu0 %832
        %v834 = vmul.f32 %v833, %v609
        %v835 = vadd.f32 %v834, 1e-12
        %v836 = vrsqrt.pop %v835
        %v837 = vmul.f32 %v829, %v836
        %v838 = vld [vmem:[%s11] sm:$0x1]
        %v840 = vlaneseq
        %v841 = vshrl.u32 %v840, 7
        %v842 = vsub.s32 0, %v841
        %v843 = vrot.slane %v838, %v842
        %v845 = vmul.f32 %v837, %v843
        %v846 = vld [vmem:[%s12] sm:$0x1]
        %v848 = vlaneseq
        %v849 = vshrl.u32 %v848, 7
        %v850 = vsub.s32 0, %v849
        %v851 = vrot.slane %v846, %v850
        %v853 = vadd.f32 %v845, %v851
        %854 = vst.msk [vmem:[%s431] sm:$0xff] %vm605, %v853
        %s855 = sand.u32 %s313, 1
        %s856 = scalar_lea.sflag [#allocation3], %s855
        %s857 = sand.u32 %s313, 1
        %s858 = smul.addr %s857, 8
        %s859 = scalar_lea.vmem [#allocation2], %s858
        // Predicated region
        $region73: #{tpu_custom_call.1} parent=71 // pred_check
          %p860 = pneg %p323
        $region74: #{tpu_custom_call.1} parent=71 // pred_check_branch
          %862 = sbr.rel (%p860) target = $region76
        $region75: #{tpu_custom_call.1} parent=71 // pred_region
          %s864 = ssub.s32 128, 128
          %865 = vsyncadd %s856, %s864
          %s866 = smul.addr %s27, 128
          %s867 = scalar_lea.hbm %s13, %s866
          %s869 = sshll.u32 %s859, 4
          %s870 = int_to_ptr.vmem [resolvable:$true] %s869
          %872 = dma.vmem_to_hbm [thread:$0]  %s870, 128, %s867, %s856
        $region76: #{tpu_custom_call.1} parent=71 // pred_fallthru
          _
      $region72: #{tpu_custom_call.1} parent=5 // pred_fallthru
        _
      %p873 = scmp.le.s32.totalorder 2, %s22
      // Predicated region
      $region77: #{tpu_custom_call.1} parent=5 // pred_check
        %p874 = pneg %p873
      $region78: #{tpu_custom_call.1} parent=5 // pred_check_branch
        %876 = sbr.rel (%p874) target = $region80
      $region79: #{tpu_custom_call.1} parent=5 // pred_region
        %s877 = ssub.s32 %s22, 2
        // Predicated region
        $region81: #{tpu_custom_call.1} parent=79 // pred_check
          %p878 = pneg %p329
        $region82: #{tpu_custom_call.1} parent=79 // pred_check_branch
          %880 = sbr.rel (%p878) target = $region84
        $region83: #{tpu_custom_call.1} parent=79 // pred_region
          %s881 = sand.u32 %s314, 1
          %s882 = scalar_lea.sflag [#allocation3], %s881
          %s883 = sand.u32 %s314, 1
          %s884 = smul.addr %s883, 8
          %s885 = scalar_lea.vmem [#allocation2], %s884
          %886 = dma.done %s882, 128
        $region84: #{tpu_custom_call.1} parent=79 // pred_fallthru
          _
      $region80: #{tpu_custom_call.1} parent=5 // pred_fallthru
        _
    $region6: #{tpu_custom_call.1} parent=1 // loop_footer
      %s26 = sadd.s32 1, %s22
    $region7: #{tpu_custom_call.1} parent=1 // loop_footer_branch
      %21 = sbr.rel target = $region3
    $region8: #{tpu_custom_call.1} parent=1 // loop_exit
      _
    %887 = vsyncpa [#allocation3], 1
    %s888 = scalar_lea.sflag [#allocation3], 1
    %889 = vsyncpa %s888, 1

// kernel: tpu_custom_call.1
$region0: #{tpu_custom_call.1}
  #allocation0 [shape = 'u32[]', space=smem, size = 0x4, offset = 0x4, fixed_abs, tag = 'smem constant byte address 0x4 - core index']
  #allocation1 [shape = 'u32[144,128]{1,0:T(1,128)}', space=vmem, size = 0x12000, scoped, tag = 'internal scratch']
  %s0 = inlined_call_operand.vmem [shape: f32[16,32], index: 0, kind: input, shape index: {}]
  %s1 = inlined_call_operand.vmem [shape: f32[16,8], index: 1, kind: input, shape index: {}]
  %s2 = inlined_call_operand.vmem [shape: f32[8,16], index: 2, kind: input, shape index: {}]
  %s3 = inlined_call_operand.vmem [shape: f32[8,32], index: 3, kind: input, shape index: {}]
  %s4 = inlined_call_operand.vmem [shape: f32[8,32], index: 4, kind: input, shape index: {}]
  %s5 = inlined_call_operand.vmem [shape: f32[1,32], index: 5, kind: input, shape index: {}]
  %s6 = inlined_call_operand.vmem [shape: f32[1,32], index: 6, kind: input, shape index: {}]
  %s7 = inlined_call_operand.vmem [shape: bf16[32,128], index: 7, kind: input, shape index: {}]
  %s8 = inlined_call_operand.vmem [shape: f32[1,128], index: 8, kind: input, shape index: {}]
  %s9 = inlined_call_operand.vmem [shape: bf16[128,32], index: 9, kind: input, shape index: {}]
  %s10 = inlined_call_operand.vmem [shape: f32[1,32], index: 10, kind: input, shape index: {}]
  %s11 = inlined_call_operand.vmem [shape: f32[1,32], index: 11, kind: input, shape index: {}]
  %s12 = inlined_call_operand.vmem [shape: f32[1,32], index: 12, kind: input, shape index: {}]
  %s13 = inlined_call_operand.hbm [shape: f32[16,32], index: 13, kind: output, shape index: {}]
  %s14 = sld [smem:[#allocation0]]
  $region85: #{tpu_custom_call.1} parent=0
    _
  %s16 = ssub.s32 1, %s14
  %s17 = scalar_select 0, %s16, %s14
  $region1: #{tpu_custom_call.1} parent=0
    #allocation2 [shape = 'u8[8192]{0}', space=vmem, size = 0x2000, scoped, tag = 'output window, operand 0']
    #allocation3 [shape = 's32[2]{0}', space=sflag, size = 0x8, scoped, tag = 'scoped memory for tpu_custom_call.1']
    %18 = vsyncpa [#allocation3], 0
    %s19 = scalar_lea.sflag [#allocation3], 1
    %20 = vsyncpa %s19, 0
    loop: start=0, step=1, limit=4
    $region2: #{tpu_custom_call.1} parent=1 // loop_pre_header
      _
    $region3: #{tpu_custom_call.1} parent=1 // loop_header
      %s22 = sphi 0, %s26
      %p23 = scmp.ge.s32.totalorder %s22, 4
      %s32 = sphi 0, %s34
      %s35 = sphi 0, %s32
      %s36 = sphi 0, %s35
      %s52 = sphi 0, %s36
      %s56 = sphi 0, %s56
      %s58 = sphi 0, %s56
      %s59 = sphi 0, %s58
      %s73 = sphi 0, %s59
      %s77 = sphi 0, %s77
      %s79 = sphi 0, %s77
      %s80 = sphi 0, %s79
      %s94 = sphi 0, %s80
      %s98 = sphi 0, %s98
      %s100 = sphi 0, %s98
      %s101 = sphi 0, %s100
      %s115 = sphi 0, %s101
      %s119 = sphi 0, %s119
      %s121 = sphi 0, %s119
      %s122 = sphi 0, %s121
      %s136 = sphi 0, %s122
      %s140 = sphi 0, %s140
      %s142 = sphi 0, %s140
      %s143 = sphi 0, %s142
      %s157 = sphi 0, %s143
      %s161 = sphi 0, %s161
      %s163 = sphi 0, %s161
      %s164 = sphi 0, %s163
      %s178 = sphi 0, %s164
      %s182 = sphi 0, %s182
      %s184 = sphi 0, %s182
      %s185 = sphi 0, %s184
      %s199 = sphi 0, %s185
      %s203 = sphi 0, %s203
      %s205 = sphi 0, %s203
      %s206 = sphi 0, %s205
      %s220 = sphi 0, %s206
      %s224 = sphi 0, %s224
      %s226 = sphi 0, %s224
      %s227 = sphi 0, %s226
      %s241 = sphi 0, %s227
      %s245 = sphi 0, %s245
      %s247 = sphi 0, %s245
      %s248 = sphi 0, %s247
      %s262 = sphi 0, %s248
      %s266 = sphi 0, %s266
      %s268 = sphi 0, %s266
      %s269 = sphi 0, %s268
      %s283 = sphi 0, %s269
      %s287 = sphi 0, %s287
      %s289 = sphi 0, %s287
      %s290 = sphi 0, %s289
      %s304 = sphi 0, %s290
      %s310 = sphi 0, %s312
      %s313 = sphi 0, %s310
      %s314 = sphi 0, %s313
      %s330 = sphi 0, %s314
    $region4: #{tpu_custom_call.1} parent=1 // loop_header_branch
      %25 = sbr.rel (%p23) target = $region8
    $region5: #{tpu_custom_call.1} parent=1 // loop_body
      %s27 = ssub.s32 %s22, 1
      %s28 = ssub.s32 %s22, 2
      %s29 = sadd.s32 %s22, 1
      %s30 = ssub.s32 %s22, %s29
      %p31 = scmp.eq.s32.totalorder %s30, 0
      %s33 = sadd.s32 %s32, 1
      %s34 = scalar_select %p31, %s32, %s33
      %p37 = pneg %p31
      %p38 = scmp.eq.s32.totalorder %s22, 1
      %p39 = por %p37, %p38
      %p40 = scmp.ne.s32.totalorder %s32, %s35
      %p41 = scmp.eq.s32.totalorder %s22, 0
      %p42 = por %p40, %p41
      %p43 = scmp.ne.s32.totalorder %s32, %s35
      %p44 = scmp.eq.s32.totalorder %s27, 1
      %p45 = por %p43, %p44
      %p46 = scmp.ne.s32.totalorder %s35, %s36
      %p47 = scmp.eq.s32.totalorder %s27, 0
      %p48 = por %p46, %p47
      %p49 = scmp.ne.s32.totalorder %s35, %s36
      %p50 = scmp.eq.s32.totalorder %s28, 1
      %p51 = por %p49, %p50
      %p53 = scmp.ne.s32.totalorder %s36, %s52
      %p54 = scmp.eq.s32.totalorder %s28, 0
      %p55 = por %p53, %p54
      %s57 = sadd.s32 %s56, 1
      %p60 = scmp.eq.s32.totalorder %s22, 1
      %p61 = scmp.ne.s32.totalorder %s56, %s58
      %p62 = scmp.eq.s32.totalorder %s22, 0
      %p63 = por %p61, %p62
      %p64 = scmp.ne.s32.totalorder %s56, %s58
      %p65 = scmp.eq.s32.totalorder %s27, 1
      %p66 = por %p64, %p65
      %p67 = scmp.ne.s32.totalorder %s58, %s59
      %p68 = scmp.eq.s32.totalorder %s27, 0
      %p69 = por %p67, %p68
      %p70 = scmp.ne.s32.totalorder %s58, %s59
      %p71 = scmp.eq.s32.totalorder %s28, 1
      %p72 = por %p70, %p71
      %p74 = scmp.ne.s32.totalorder %s59, %s73
      %p75 = scmp.eq.s32.totalorder %s28, 0
      %p76 = por %p74, %p75
      %s78 = sadd.s32 %s77, 1
      %p81 = scmp.eq.s32.totalorder %s22, 1
      %p82 = scmp.ne.s32.totalorder %s77, %s79
      %p83 = scmp.eq.s32.totalorder %s22, 0
      %p84 = por %p82, %p83
      %p85 = scmp.ne.s32.totalorder %s77, %s79
      %p86 = scmp.eq.s32.totalorder %s27, 1
      %p87 = por %p85, %p86
      %p88 = scmp.ne.s32.totalorder %s79, %s80
      %p89 = scmp.eq.s32.totalorder %s27, 0
      %p90 = por %p88, %p89
      %p91 = scmp.ne.s32.totalorder %s79, %s80
      %p92 = scmp.eq.s32.totalorder %s28, 1
      %p93 = por %p91, %p92
      %p95 = scmp.ne.s32.totalorder %s80, %s94
      %p96 = scmp.eq.s32.totalorder %s28, 0
      %p97 = por %p95, %p96
      %s99 = sadd.s32 %s98, 1
      %p102 = scmp.eq.s32.totalorder %s22, 1
      %p103 = scmp.ne.s32.totalorder %s98, %s100
      %p104 = scmp.eq.s32.totalorder %s22, 0
      %p105 = por %p103, %p104
      %p106 = scmp.ne.s32.totalorder %s98, %s100
      %p107 = scmp.eq.s32.totalorder %s27, 1
      %p108 = por %p106, %p107
      %p109 = scmp.ne.s32.totalorder %s100, %s101
      %p110 = scmp.eq.s32.totalorder %s27, 0
      %p111 = por %p109, %p110
      %p112 = scmp.ne.s32.totalorder %s100, %s101
      %p113 = scmp.eq.s32.totalorder %s28, 1
      %p114 = por %p112, %p113
      %p116 = scmp.ne.s32.totalorder %s101, %s115
      %p117 = scmp.eq.s32.totalorder %s28, 0
      %p118 = por %p116, %p117
      %s120 = sadd.s32 %s119, 1
      %p123 = scmp.eq.s32.totalorder %s22, 1
      %p124 = scmp.ne.s32.totalorder %s119, %s121
      %p125 = scmp.eq.s32.totalorder %s22, 0
      %p126 = por %p124, %p125
      %p127 = scmp.ne.s32.totalorder %s119, %s121
      %p128 = scmp.eq.s32.totalorder %s27, 1
      %p129 = por %p127, %p128
      %p130 = scmp.ne.s32.totalorder %s121, %s122
      %p131 = scmp.eq.s32.totalorder %s27, 0
      %p132 = por %p130, %p131
      %p133 = scmp.ne.s32.totalorder %s121, %s122
      %p134 = scmp.eq.s32.totalorder %s28, 1
      %p135 = por %p133, %p134
      %p137 = scmp.ne.s32.totalorder %s122, %s136
      %p138 = scmp.eq.s32.totalorder %s28, 0
      %p139 = por %p137, %p138
      %s141 = sadd.s32 %s140, 1
      %p144 = scmp.eq.s32.totalorder %s22, 1
      %p145 = scmp.ne.s32.totalorder %s140, %s142
      %p146 = scmp.eq.s32.totalorder %s22, 0
      %p147 = por %p145, %p146
      %p148 = scmp.ne.s32.totalorder %s140, %s142
      %p149 = scmp.eq.s32.totalorder %s27, 1
      %p150 = por %p148, %p149
      %p151 = scmp.ne.s32.totalorder %s142, %s143
      %p152 = scmp.eq.s32.totalorder %s27, 0
      %p153 = por %p151, %p152
      %p154 = scmp.ne.s32.totalorder %s142, %s143
      %p155 = scmp.eq.s32.totalorder %s28, 1
      %p156 = por %p154, %p155
      %p158 = scmp.ne.s32.totalorder %s143, %s157
      %p159 = scmp.eq.s32.totalorder %s28, 0
      %p160 = por %p158, %p159
      %s162 = sadd.s32 %s161, 1
      %p165 = scmp.eq.s32.totalorder %s22, 1
      %p166 = scmp.ne.s32.totalorder %s161, %s163
      %p167 = scmp.eq.s32.totalorder %s22, 0
      %p168 = por %p166, %p167
      %p169 = scmp.ne.s32.totalorder %s161, %s163
      %p170 = scmp.eq.s32.totalorder %s27, 1
      %p171 = por %p169, %p170
      %p172 = scmp.ne.s32.totalorder %s163, %s164
      %p173 = scmp.eq.s32.totalorder %s27, 0
      %p174 = por %p172, %p173
      %p175 = scmp.ne.s32.totalorder %s163, %s164
      %p176 = scmp.eq.s32.totalorder %s28, 1
      %p177 = por %p175, %p176
      %p179 = scmp.ne.s32.totalorder %s164, %s178
      %p180 = scmp.eq.s32.totalorder %s28, 0
      %p181 = por %p179, %p180
      %s183 = sadd.s32 %s182, 1
      %p186 = scmp.eq.s32.totalorder %s22, 1
      %p187 = scmp.ne.s32.totalorder %s182, %s184
      %p188 = scmp.eq.s32.totalorder %s22, 0
      %p189 = por %p187, %p188
      %p190 = scmp.ne.s32.totalorder %s182, %s184
      %p191 = scmp.eq.s32.totalorder %s27, 1
      %p192 = por %p190, %p191
      %p193 = scmp.ne.s32.totalorder %s184, %s185
      %p194 = scmp.eq.s32.totalorder %s27, 0
      %p195 = por %p193, %p194
      %p196 = scmp.ne.s32.totalorder %s184, %s185
      %p197 = scmp.eq.s32.totalorder %s28, 1
      %p198 = por %p196, %p197
      %p200 = scmp.ne.s32.totalorder %s185, %s199
      %p201 = scmp.eq.s32.totalorder %s28, 0
      %p202 = por %p200, %p201
      %s204 = sadd.s32 %s203, 1
      %p207 = scmp.eq.s32.totalorder %s22, 1
      %p208 = scmp.ne.s32.totalorder %s203, %s205
      %p209 = scmp.eq.s32.totalorder %s22, 0
      %p210 = por %p208, %p209
      %p211 = scmp.ne.s32.totalorder %s203, %s205
      %p212 = scmp.eq.s32.totalorder %s27, 1
      %p213 = por %p211, %p212
      %p214 = scmp.ne.s32.totalorder %s205, %s206
      %p215 = scmp.eq.s32.totalorder %s27, 0
      %p216 = por %p214, %p215
      %p217 = scmp.ne.s32.totalorder %s205, %s206
      %p218 = scmp.eq.s32.totalorder %s28, 1
      %p219 = por %p217, %p218
      %p221 = scmp.ne.s32.totalorder %s206, %s220
      %p222 = scmp.eq.s32.totalorder %s28, 0
      %p223 = por %p221, %p222
      %s225 = sadd.s32 %s224, 1
      %p228 = scmp.eq.s32.totalorder %s22, 1
      %p229 = scmp.ne.s32.totalorder %s224, %s226
      %p230 = scmp.eq.s32.totalorder %s22, 0
      %p231 = por %p229, %p230
      %p232 = scmp.ne.s32.totalorder %s224, %s226
      %p233 = scmp.eq.s32.totalorder %s27, 1
      %p234 = por %p232, %p233
      %p235 = scmp.ne.s32.totalorder %s226, %s227
      %p236 = scmp.eq.s32.totalorder %s27, 0
      %p237 = por %p235, %p236
      %p238 = scmp.ne.s32.totalorder %s226, %s227
      %p239 = scmp.eq.s32.totalorder %s28, 1
      %p240 = por %p238, %p239
      %p242 = scmp.ne.s32.totalorder %s227, %s241
      %p243 = scmp.eq.s32.totalorder %s28, 0
      %p244 = por %p242, %p243
      %s246 = sadd.s32 %s245, 1
      %p249 = scmp.eq.s32.totalorder %s22, 1
      %p250 = scmp.ne.s32.totalorder %s245, %s247
      %p251 = scmp.eq.s32.totalorder %s22, 0
      %p252 = por %p250, %p251
      %p253 = scmp.ne.s32.totalorder %s245, %s247
      %p254 = scmp.eq.s32.totalorder %s27, 1
      %p255 = por %p253, %p254
      %p256 = scmp.ne.s32.totalorder %s247, %s248
      %p257 = scmp.eq.s32.totalorder %s27, 0
      %p258 = por %p256, %p257
      %p259 = scmp.ne.s32.totalorder %s247, %s248
      %p260 = scmp.eq.s32.totalorder %s28, 1
      %p261 = por %p259, %p260
      %p263 = scmp.ne.s32.totalorder %s248, %s262
      %p264 = scmp.eq.s32.totalorder %s28, 0
      %p265 = por %p263, %p264
      %s267 = sadd.s32 %s266, 1
      %p270 = scmp.eq.s32.totalorder %s22, 1
      %p271 = scmp.ne.s32.totalorder %s266, %s268
      %p272 = scmp.eq.s32.totalorder %s22, 0
      %p273 = por %p271, %p272
      %p274 = scmp.ne.s32.totalorder %s266, %s268
      %p275 = scmp.eq.s32.totalorder %s27, 1
      %p276 = por %p274, %p275
      %p277 = scmp.ne.s32.totalorder %s268, %s269
      %p278 = scmp.eq.s32.totalorder %s27, 0
      %p279 = por %p277, %p278
      %p280 = scmp.ne.s32.totalorder %s268, %s269
      %p281 = scmp.eq.s32.totalorder %s28, 1
      %p282 = por %p280, %p281
      %p284 = scmp.ne.s32.totalorder %s269, %s283
      %p285 = scmp.eq.s32.totalorder %s28, 0
      %p286 = por %p284, %p285
      %s288 = sadd.s32 %s287, 1
      %p291 = scmp.eq.s32.totalorder %s22, 1
      %p292 = scmp.ne.s32.totalorder %s287, %s289
      %p293 = scmp.eq.s32.totalorder %s22, 0
      %p294 = por %p292, %p293
      %p295 = scmp.ne.s32.totalorder %s287, %s289
      %p296 = scmp.eq.s32.totalorder %s27, 1
      %p297 = por %p295, %p296
      %p298 = scmp.ne.s32.totalorder %s289, %s290
      %p299 = scmp.eq.s32.totalorder %s27, 0
      %p300 = por %p298, %p299
      %p301 = scmp.ne.s32.totalorder %s289, %s290
      %p302 = scmp.eq.s32.totalorder %s28, 1
      %p303 = por %p301, %p302
      %p305 = scmp.ne.s32.totalorder %s290, %s304
      %p306 = scmp.eq.s32.totalorder %s28, 0
      %p307 = por %p305, %p306
      %s308 = ssub.s32 %s22, %s29
      %p309 = scmp.eq.s32.totalorder %s308, 0
      %s311 = sadd.s32 %s310, 1
      %s312 = scalar_select %p309, %s310, %s311
      %p315 = pneg %p309
      %p316 = scmp.eq.s32.totalorder %s22, 1
      %p317 = por %p315, %p316
      %p318 = scmp.ne.s32.totalorder %s310, %s313
      %p319 = scmp.eq.s32.totalorder %s22, 0
      %p320 = por %p318, %p319
      %p321 = scmp.ne.s32.totalorder %s310, %s313
      %p322 = scmp.eq.s32.totalorder %s27, 1
      %p323 = por %p321, %p322
      %p324 = scmp.ne.s32.totalorder %s313, %s314
      %p325 = scmp.eq.s32.totalorder %s27, 0
      %p326 = por %p324, %p325
      %p327 = scmp.ne.s32.totalorder %s313, %s314
      %p328 = scmp.eq.s32.totalorder %s28, 1
      %p329 = por %p327, %p328
      %p331 = scmp.ne.s32.totalorder %s314, %s330
      %p332 = scmp.eq.s32.totalorder %s28, 0
      %p333 = por %p331, %p332
      %p334 = scmp.le.s32.totalorder 1, %s22
      %p335 = scmp.lt.s32.totalorder %s22, 3
      %p336 = pnand %p334, %p335
      %p337 = pneg %p336
      // Predicated region
      $region9: #{tpu_custom_call.1} parent=5 // pred_check
        _
      $region10: #{tpu_custom_call.1} parent=5 // pred_check_branch
        %339 = sbr.rel (%p336) target = $region12
      $region11: #{tpu_custom_call.1} parent=5 // pred_region
        %s340 = ssub.s32 %s22, 1
        // Predicated region
        $region13: #{tpu_custom_call.1} parent=11 // pred_check
          %p341 = pneg %p69
        $region14: #{tpu_custom_call.1} parent=11 // pred_check_branch
          %343 = sbr.rel (%p341) target = $region16
        $region15: #{tpu_custom_call.1} parent=11 // pred_region
          _
        $region16: #{tpu_custom_call.1} parent=11 // pred_fallthru
          _
        // Predicated region
        $region17: #{tpu_custom_call.1} parent=11 // pred_check
          %p344 = pneg %p90
        $region18: #{tpu_custom_call.1} parent=11 // pred_check_branch
          %346 = sbr.rel (%p344) target = $region20
        $region19: #{tpu_custom_call.1} parent=11 // pred_region
          _
        $region20: #{tpu_custom_call.1} parent=11 // pred_fallthru
          _
        // Predicated region
        $region21: #{tpu_custom_call.1} parent=11 // pred_check
          %p347 = pneg %p111
        $region22: #{tpu_custom_call.1} parent=11 // pred_check_branch
          %349 = sbr.rel (%p347) target = $region24
        $region23: #{tpu_custom_call.1} parent=11 // pred_region
          _
        $region24: #{tpu_custom_call.1} parent=11 // pred_fallthru
          _
        // Predicated region
        $region25: #{tpu_custom_call.1} parent=11 // pred_check
          %p350 = pneg %p132
        $region26: #{tpu_custom_call.1} parent=11 // pred_check_branch
          %352 = sbr.rel (%p350) target = $region28
        $region27: #{tpu_custom_call.1} parent=11 // pred_region
          _
        $region28: #{tpu_custom_call.1} parent=11 // pred_fallthru
          _
        // Predicated region
        $region29: #{tpu_custom_call.1} parent=11 // pred_check
          %p353 = pneg %p153
        $region30: #{tpu_custom_call.1} parent=11 // pred_check_branch
          %355 = sbr.rel (%p353) target = $region32
        $region31: #{tpu_custom_call.1} parent=11 // pred_region
          _
        $region32: #{tpu_custom_call.1} parent=11 // pred_fallthru
          _
        // Predicated region
        $region33: #{tpu_custom_call.1} parent=11 // pred_check
          %p356 = pneg %p174
        $region34: #{tpu_custom_call.1} parent=11 // pred_check_branch
          %358 = sbr.rel (%p356) target = $region36
        $region35: #{tpu_custom_call.1} parent=11 // pred_region
          _
        $region36: #{tpu_custom_call.1} parent=11 // pred_fallthru
          _
        // Predicated region
        $region37: #{tpu_custom_call.1} parent=11 // pred_check
          %p359 = pneg %p195
        $region38: #{tpu_custom_call.1} parent=11 // pred_check_branch
          %361 = sbr.rel (%p359) target = $region40
        $region39: #{tpu_custom_call.1} parent=11 // pred_region
          _
        $region40: #{tpu_custom_call.1} parent=11 // pred_fallthru
          _
        // Predicated region
        $region41: #{tpu_custom_call.1} parent=11 // pred_check
          %p362 = pneg %p216
        $region42: #{tpu_custom_call.1} parent=11 // pred_check_branch
          %364 = sbr.rel (%p362) target = $region44
        $region43: #{tpu_custom_call.1} parent=11 // pred_region
          _
        $region44: #{tpu_custom_call.1} parent=11 // pred_fallthru
          _
        // Predicated region
        $region45: #{tpu_custom_call.1} parent=11 // pred_check
          %p365 = pneg %p237
        $region46: #{tpu_custom_call.1} parent=11 // pred_check_branch
          %367 = sbr.rel (%p365) target = $region48
        $region47: #{tpu_custom_call.1} parent=11 // pred_region
          _
        $region48: #{tpu_custom_call.1} parent=11 // pred_fallthru
          _
        // Predicated region
        $region49: #{tpu_custom_call.1} parent=11 // pred_check
          %p368 = pneg %p258
        $region50: #{tpu_custom_call.1} parent=11 // pred_check_branch
          %370 = sbr.rel (%p368) target = $region52
        $region51: #{tpu_custom_call.1} parent=11 // pred_region
          _
        $region52: #{tpu_custom_call.1} parent=11 // pred_fallthru
          _
        // Predicated region
        $region53: #{tpu_custom_call.1} parent=11 // pred_check
          %p371 = pneg %p279
        $region54: #{tpu_custom_call.1} parent=11 // pred_check_branch
          %373 = sbr.rel (%p371) target = $region56
        $region55: #{tpu_custom_call.1} parent=11 // pred_region
          _
        $region56: #{tpu_custom_call.1} parent=11 // pred_fallthru
          _
        // Predicated region
        $region57: #{tpu_custom_call.1} parent=11 // pred_check
          %p374 = pneg %p300
        $region58: #{tpu_custom_call.1} parent=11 // pred_check_branch
          %376 = sbr.rel (%p374) target = $region60
        $region59: #{tpu_custom_call.1} parent=11 // pred_region
          _
        $region60: #{tpu_custom_call.1} parent=11 // pred_fallthru
          _
      $region12: #{tpu_custom_call.1} parent=5 // pred_fallthru
        _
      %p377 = scmp.lt.s32.totalorder %s22, 2
      // Predicated region
      $region61: #{tpu_custom_call.1} parent=5 // pred_check
        %p378 = pneg %p377
      $region62: #{tpu_custom_call.1} parent=5 // pred_check_branch
        %380 = sbr.rel (%p378) target = $region64
      $region63: #{tpu_custom_call.1} parent=5 // pred_region
        // Predicated region
        $region65: #{tpu_custom_call.1} parent=63 // pred_check
          %p381 = pneg %p42
        $region66: #{tpu_custom_call.1} parent=63 // pred_check_branch
          %383 = sbr.rel (%p381) target = $region68
        $region67: #{tpu_custom_call.1} parent=63 // pred_region
          %p384 = scmp.lt.s32.totalorder %s22, 1
          %s385 = scalar_select %p384, %s22, 1
          %s386 = smul.addr %s385, 8
          %s387 = scalar_lea.vmem %s0, %s386
        $region68: #{tpu_custom_call.1} parent=63 // pred_fallthru
          _
      $region64: #{tpu_custom_call.1} parent=5 // pred_fallthru
        _
      %p388 = scmp.le.s32.totalorder 1, %s22
      %p389 = scmp.lt.s32.totalorder %s22, 3
      %p390 = pnand %p388, %p389
      %p391 = pneg %p390
      // Predicated region
      $region69: #{tpu_custom_call.1} parent=5 // pred_check
        _
      $region70: #{tpu_custom_call.1} parent=5 // pred_check_branch
        %393 = sbr.rel (%p390) target = $region72
      $region71: #{tpu_custom_call.1} parent=5 // pred_region
        %s394 = ssub.s32 %s22, 1
        %p395 = scmp.lt.s32.totalorder %s27, 1
        %s396 = scalar_select %p395, %s27, 1
        %s397 = smul.addr %s396, 8
        %s398 = scalar_lea.vmem %s0, %s397
        %p399 = pneg %p48
        %p400 = pneg %p45
        %p401 = pneg %p69
        %p402 = pneg %p66
        %p403 = pneg %p90
        %p404 = pneg %p87
        %p405 = pneg %p111
        %p406 = pneg %p108
        %p407 = pneg %p132
        %p408 = pneg %p129
        %p409 = pneg %p153
        %p410 = pneg %p150
        %p411 = pneg %p174
        %p412 = pneg %p171
        %p413 = pneg %p195
        %p414 = pneg %p192
        %p415 = pneg %p216
        %p416 = pneg %p213
        %p417 = pneg %p237
        %p418 = pneg %p234
        %p419 = pneg %p258
        %p420 = pneg %p255
        %p421 = pneg %p279
        %p422 = pneg %p276
        %p423 = pneg %p300
        %p424 = pneg %p297
        %p425 = pneg %p326
        %p426 = pneg %p323
        %s427 = sand.u32 %s313, 1
        %s428 = scalar_lea.sflag [#allocation3], %s427
        %s429 = sand.u32 %s313, 1
        %s430 = smul.addr %s429, 8
        %s431 = scalar_lea.vmem [#allocation2], %s430
        %p432 = scmp.lt.s32.totalorder %s27, 1
        %s433 = scalar_select %p432, %s27, 1
        %s434 = smul.addr %s433, 8
        %s435 = scalar_lea.vmem %s0, %s434
        %v437 = vld [vmem:[%s435] sm:$0xff]
        %v438 = vld [vmem:[%s1] sm:$0xff]
        %v439 = vld [vmem:[%s1 + $0x8] sm:$0xff]
        %v440 = vld [vmem:[%s2] sm:$0xff]
        %v441 = vld [vmem:[%s3] sm:$0xff]
        %v442 = vld [vmem:[%s4] sm:$0xff]
        %vm443 = vcmask 64512
        %v445 = vsel %vm443, %v438, 0
        %v448 = vsel %vm443, %v439, 0
        %450 = vmatprep.subr.mxu0 0.0
        %451 = vmatpush1.msra.mxu0 %v437
        %452 = vmatprep.subr.mxu0 0.0
        %453 = vmatpush1.msra.mxu0 0.0
        %454 = vmatprep.subr.mxu0 0.0
        %455 = vmatpush1.msra.mxu0 0.0
        %456 = vmatprep.subr.mxu0 0.0
        %457 = vmatpush1.msra.mxu0 0.0
        %458 = vmatprep.subr.mxu0 0.0
        %459 = vmatpush1.msra.mxu0 0.0
        %460 = vmatprep.subr.mxu0 0.0
        %461 = vmatpush1.msra.mxu0 0.0
        %462 = vmatprep.subr.mxu0 0.0
        %463 = vmatpush1.msra.mxu0 0.0
        %464 = vmatprep.subr.mxu0 0.0
        %465 = vmatpush1.msra.mxu0 0.0
        %466 = vmatprep.subr.mxu0 0.0
        %467 = vmatpush1.msra.mxu0 0.0
        %468 = vmatprep.subr.mxu0 0.0
        %469 = vmatpush1.msra.mxu0 0.0
        %470 = vmatprep.subr.mxu0 0.0
        %471 = vmatpush1.msra.mxu0 0.0
        %472 = vmatprep.subr.mxu0 0.0
        %473 = vmatpush1.msra.mxu0 0.0
        %474 = vmatprep.subr.mxu0 0.0
        %475 = vmatpush1.msra.mxu0 0.0
        %476 = vmatprep.subr.mxu0 0.0
        %477 = vmatpush1.msra.mxu0 0.0
        %478 = vmatprep.subr.mxu0 0.0
        %479 = vmatpush1.msra.mxu0 0.0
        %480 = vmatprep.subr.mxu0 0.0
        %481 = vmatpush1.msra.mxu0 0.0
        %482 = vmatprep.subr.mxu0 0.0
        %483 = vmatpush1.msra.mxu0 0.0
        %484 = vmatprep.subr.mxu0 0.0
        %485 = vmatpush1.msra.mxu0 0.0
        %486 = vmatprep.subr.mxu0 0.0
        %487 = vmatpush1.msra.mxu0 0.0
        %488 = vmatprep.subr.mxu0 0.0
        %489 = vmatpush1.msra.mxu0 0.0
        %490 = vmatprep.subr.mxu0 0.0
        %491 = vmatpush1.msra.mxu0 0.0
        %492 = vmatprep.subr.mxu0 0.0
        %493 = vmatpush1.msra.mxu0 0.0
        %494 = vmatprep.subr.mxu0 0.0
        %495 = vmatpush1.msra.mxu0 0.0
        %496 = vmatprep.subr.mxu0 0.0
        %497 = vmatpush1.msra.mxu0 0.0
        %498 = vmatprep.subr.mxu0 0.0
        %499 = vmatpush1.msra.mxu0 0.0
        %500 = vmatprep.subr.mxu0 0.0
        %501 = vmatpush1.msra.mxu0 0.0
        %502 = vmatprep.subr.mxu0 0.0
        %503 = vmatpush1.msra.mxu0 0.0
        %504 = vmatprep.subr.mxu0 0.0
        %505 = vmatpush1.msra.mxu0 0.0
        %506 = vmatprep.subr.mxu0 0.0
        %507 = vmatpush1.msra.mxu0 0.0
        %508 = vmatprep.subr.mxu0 0.0
        %509 = vmatpush1.msra.mxu0 0.0
        %510 = vmatprep.subr.mxu0 0.0
        %511 = vmatpush1.msra.mxu0 0.0
        %512 = vmatprep.subr.mxu0 0.0
        %513 = vmatpush1.msra.mxu0 0.0
        %514 = vmatprep.mubr.f32.mxu0 0.0
        %515 = vmatmul.mubr.f32.gmra.mrb[0].mxu0 %v445
        %v516 = vpop.f32.mrb[0].mxu0
        %v517 = vadd.f32 0.0, %v516
        %v518 = vpop.f32.mrb[0].mxu0
        %519 = vmatprep.mubr.f32.mxu0 0.0
        %520 = vmatmul.mubr.f32.gmra.mrb[0].mxu0 %v448
        %v521 = vpop.f32.mrb[0].mxu0
        %v522 = vadd.f32 0.0, %v521
        %v523 = vpop.f32.mrb[0].mxu0
        %524 = vdwg.mxu0
        %v525 = vmul.f32 %v517, %v441
        %v526 = vmul.f32 %v522, %v442
        %v527 = vsub.f32 %v525, %v526
        %v528 = vmul.f32 %v517, %v442
        %v529 = vmul.f32 %v522, %v441
        %v530 = vadd.f32 %v528, %v529
        %vm531 = vcmask 130048
        %v533 = vsel %vm531, %v440, 0
        %535 = vmatprep.subr.mxu0 0.0
        %536 = vmatpush1.msra.mxu0 %v527
        %537 = vmatprep.subr.mxu0 0.0
        %538 = vmatpush1.msra.mxu0 %v530
        %539 = vmatprep.subr.mxu0 0.0
        %540 = vmatpush1.msra.mxu0 0.0
        %541 = vmatprep.subr.mxu0 0.0
        %542 = vmatpush1.msra.mxu0 0.0
        %543 = vmatprep.subr.mxu0 0.0
        %544 = vmatpush1.msra.mxu0 0.0
        %545 = vmatprep.subr.mxu0 0.0
        %546 = vmatpush1.msra.mxu0 0.0
        %547 = vmatprep.subr.mxu0 0.0
        %548 = vmatpush1.msra.mxu0 0.0
        %549 = vmatprep.subr.mxu0 0.0
        %550 = vmatpush1.msra.mxu0 0.0
        %551 = vmatprep.subr.mxu0 0.0
        %552 = vmatpush1.msra.mxu0 0.0
        %553 = vmatprep.subr.mxu0 0.0
        %554 = vmatpush1.msra.mxu0 0.0
        %555 = vmatprep.subr.mxu0 0.0
        %556 = vmatpush1.msra.mxu0 0.0
        %557 = vmatprep.subr.mxu0 0.0
        %558 = vmatpush1.msra.mxu0 0.0
        %559 = vmatprep.subr.mxu0 0.0
        %560 = vmatpush1.msra.mxu0 0.0
        %561 = vmatprep.subr.mxu0 0.0
        %562 = vmatpush1.msra.mxu0 0.0
        %563 = vmatprep.subr.mxu0 0.0
        %564 = vmatpush1.msra.mxu0 0.0
        %565 = vmatprep.subr.mxu0 0.0
        %566 = vmatpush1.msra.mxu0 0.0
        %567 = vmatprep.subr.mxu0 0.0
        %568 = vmatpush1.msra.mxu0 0.0
        %569 = vmatprep.subr.mxu0 0.0
        %570 = vmatpush1.msra.mxu0 0.0
        %571 = vmatprep.subr.mxu0 0.0
        %572 = vmatpush1.msra.mxu0 0.0
        %573 = vmatprep.subr.mxu0 0.0
        %574 = vmatpush1.msra.mxu0 0.0
        %575 = vmatprep.subr.mxu0 0.0
        %576 = vmatpush1.msra.mxu0 0.0
        %577 = vmatprep.subr.mxu0 0.0
        %578 = vmatpush1.msra.mxu0 0.0
        %579 = vmatprep.subr.mxu0 0.0
        %580 = vmatpush1.msra.mxu0 0.0
        %581 = vmatprep.subr.mxu0 0.0
        %582 = vmatpush1.msra.mxu0 0.0
        %583 = vmatprep.subr.mxu0 0.0
        %584 = vmatpush1.msra.mxu0 0.0
        %585 = vmatprep.subr.mxu0 0.0
        %586 = vmatpush1.msra.mxu0 0.0
        %587 = vmatprep.subr.mxu0 0.0
        %588 = vmatpush1.msra.mxu0 0.0
        %589 = vmatprep.subr.mxu0 0.0
        %590 = vmatpush1.msra.mxu0 0.0
        %591 = vmatprep.subr.mxu0 0.0
        %592 = vmatpush1.msra.mxu0 0.0
        %593 = vmatprep.subr.mxu0 0.0
        %594 = vmatpush1.msra.mxu0 0.0
        %595 = vmatprep.subr.mxu0 0.0
        %596 = vmatpush1.msra.mxu0 0.0
        %597 = vmatprep.subr.mxu0 0.0
        %598 = vmatpush1.msra.mxu0 0.0
        %599 = vmatprep.mubr.f32.mxu0 0.0
        %600 = vmatmul.mubr.f32.gmra.mrb[0].mxu0 %v533
        %v601 = vpop.f32.mrb[0].mxu0
        %v602 = vadd.f32 %v437, %v601
        %v603 = vpop.f32.mrb[0].mxu0
        %604 = vdwg.mxu0
        %vm605 = vcmask 261120
        %v606 = vsel %vm605, %v602, 0.0
        %607 = vadd.xlane.f32.xlu0 %v606
        %v608 = vpop.xlane.xlu0 %607
        %v609 = vrcp.pop 32.0
        %v610 = vmul.f32 %v608, %v609
        %v611 = vsub.f32 %v602, %v610
        %v612 = vmul.f32 %v611, %v611
        %v613 = vsel %vm605, %v612, 0.0
        %614 = vadd.xlane.f32.xlu0 %v613
        %v615 = vpop.xlane.xlu0 %614
        %v616 = vmul.f32 %v615, %v609
        %v617 = vadd.f32 %v616, 1e-12
        %v618 = vrsqrt.pop %v617
        %v619 = vmul.f32 %v611, %v618
        %v620 = vld [vmem:[%s5] sm:$0x1]
        %v622 = vlaneseq
        %v623 = vshrl.u32 %v622, 7
        %v624 = vsub.s32 0, %v623
        %v625 = vrot.slane %v620, %v624
        %v627 = vmul.f32 %v619, %v625
        %v628 = vld [vmem:[%s6] sm:$0x1]
        %v630 = vlaneseq
        %v631 = vshrl.u32 %v630, 7
        %v632 = vsub.s32 0, %v631
        %v633 = vrot.slane %v628, %v632
        %v635 = vadd.f32 %v627, %v633
        %v636 = vpack.c.bf16 %v635, %v635
        %v637 = vld [vmem:[%s7] sm:$0xf]
        %v638 = vld [vmem:[%s7 + $0x4] sm:$0xf]
        %v639 = vld [vmem:[%s7 + $0x8] sm:$0xf]
        %v640 = vld [vmem:[%s7 + $0xc] sm:$0xf]
        %v641 = vld [vmem:[%s8] sm:$0x1]
        %v643 = vlaneseq
        %v644 = vshrl.u32 %v643, 7
        %v645 = vsub.s32 0, %v644
        %v646 = vrot.slane %v641, %v645
        %v652 = vunpack.c.l.b16 %v637
        %v653 = vunpack.c.l.b16 %v638
        %v654 = vunpack.c.l.b16 %v639
        %v655 = vunpack.c.l.b16 %v640
        %v656 = vpack.c.b16 %v653, %v652
        %v657 = vpack.c.b16 %v655, %v654
        %v661 = vsel %vm605, %v636, 0
        %663 = vmatprep.subr.bf16.mxu0 0
        %664 = vmatpush1.bf16.msra.mxu0 %v656
        %665 = vmatprep.subr.bf16.mxu0 0
        %666 = vmatpush1.bf16.msra.mxu0 %v657
        %667 = vmatprep.subr.bf16.mxu0 0
        %668 = vmatpush1.bf16.msra.mxu0 0
        %669 = vmatprep.subr.bf16.mxu0 0
        %670 = vmatpush1.bf16.msra.mxu0 0
        %671 = vmatprep.subr.bf16.mxu0 0
        %672 = vmatpush1.bf16.msra.mxu0 0
        %673 = vmatprep.subr.bf16.mxu0 0
        %674 = vmatpush1.bf16.msra.mxu0 0
        %675 = vmatprep.subr.bf16.mxu0 0
        %676 = vmatpush1.bf16.msra.mxu0 0
        %677 = vmatprep.subr.bf16.mxu0 0
        %678 = vmatpush1.bf16.msra.mxu0 0
        %679 = vmatprep.subr.bf16.mxu0 0
        %680 = vmatpush1.bf16.msra.mxu0 0
        %681 = vmatprep.subr.bf16.mxu0 0
        %682 = vmatpush1.bf16.msra.mxu0 0
        %683 = vmatprep.subr.bf16.mxu0 0
        %684 = vmatpush1.bf16.msra.mxu0 0
        %685 = vmatprep.subr.bf16.mxu0 0
        %686 = vmatpush1.bf16.msra.mxu0 0
        %687 = vmatprep.subr.bf16.mxu0 0
        %688 = vmatpush1.bf16.msra.mxu0 0
        %689 = vmatprep.subr.bf16.mxu0 0
        %690 = vmatpush1.bf16.msra.mxu0 0
        %691 = vmatprep.subr.bf16.mxu0 0
        %692 = vmatpush1.bf16.msra.mxu0 0
        %693 = vmatprep.subr.bf16.mxu0 0
        %694 = vmatpush1.bf16.msra.mxu0 0
        %695 = vmatprep.mubr.bf16.mxu0 0
        %696 = vmatmul.mubr.bf16.gmra.mrb[0].mxu0 %v661
        %v697 = vpop.f32.mrb[0].mxu0
        %v698 = vadd.f32 %v646, %v697
        %v699 = vpop.f32.mrb[0].mxu0
        %v700 = vpop.f32.mrb[0].mxu0
        %v701 = vpop.f32.mrb[0].mxu0
        %702 = vdwg.mxu0
        %v703 = vmul.f32 %v698, 0.5
        %v704 = vmul.f32 %v698, 0.044715
        %v705 = vmul.f32 %v704, %v698
        %v706 = vmul.f32 %v705, %v698
        %v707 = vadd.f32 %v698, %v706
        %v708 = vmul.f32 %v707, 0.7978846
        %v709 = vtanh.pop %v708
        %v710 = vadd.f32 %v709, 1.0
        %v711 = vmul.f32 %v703, %v710
        %v712 = vpack.c.bf16 %v711, %v711
        %v713 = vld [vmem:[%s9] sm:$0xf]
        %v714 = vld [vmem:[%s9 + $0x4] sm:$0xf]
        %v715 = vld [vmem:[%s9 + $0x8] sm:$0xf]
        %v716 = vld [vmem:[%s9 + $0xc] sm:$0xf]
        %v717 = vld [vmem:[%s9 + $0x10] sm:$0xf]
        %v718 = vld [vmem:[%s9 + $0x14] sm:$0xf]
        %v719 = vld [vmem:[%s9 + $0x18] sm:$0xf]
        %v720 = vld [vmem:[%s9 + $0x1c] sm:$0xf]
        %v721 = vld [vmem:[%s9 + $0x20] sm:$0xf]
        %v722 = vld [vmem:[%s9 + $0x24] sm:$0xf]
        %v723 = vld [vmem:[%s9 + $0x28] sm:$0xf]
        %v724 = vld [vmem:[%s9 + $0x2c] sm:$0xf]
        %v725 = vld [vmem:[%s9 + $0x30] sm:$0xf]
        %v726 = vld [vmem:[%s9 + $0x34] sm:$0xf]
        %v727 = vld [vmem:[%s9 + $0x38] sm:$0xf]
        %v728 = vld [vmem:[%s9 + $0x3c] sm:$0xf]
        %v729 = vld [vmem:[%s10] sm:$0x1]
        %v731 = vlaneseq
        %v732 = vshrl.u32 %v731, 7
        %v733 = vsub.s32 0, %v732
        %v734 = vrot.slane %v729, %v733
        %v752 = vunpack.c.l.b16 %v713
        %v753 = vunpack.c.l.b16 %v714
        %v754 = vunpack.c.l.b16 %v715
        %v755 = vunpack.c.l.b16 %v716
        %v756 = vunpack.c.l.b16 %v717
        %v757 = vunpack.c.l.b16 %v718
        %v758 = vunpack.c.l.b16 %v719
        %v759 = vunpack.c.l.b16 %v720
        %v760 = vunpack.c.l.b16 %v721
        %v761 = vunpack.c.l.b16 %v722
        %v762 = vunpack.c.l.b16 %v723
        %v763 = vunpack.c.l.b16 %v724
        %v764 = vunpack.c.l.b16 %v725
        %v765 = vunpack.c.l.b16 %v726
        %v766 = vunpack.c.l.b16 %v727
        %v767 = vunpack.c.l.b16 %v728
        %v768 = vpack.c.b16 %v753, %v752
        %v769 = vpack.c.b16 %v755, %v754
        %v770 = vpack.c.b16 %v757, %v756
        %v771 = vpack.c.b16 %v759, %v758
        %v772 = vpack.c.b16 %v761, %v760
        %v773 = vpack.c.b16 %v763, %v762
        %v774 = vpack.c.b16 %v765, %v764
        %v775 = vpack.c.b16 %v767, %v766
        %784 = vmatprep.subr.bf16.mxu0 0
        %785 = vmatpush1.bf16.msra.mxu0 %v768
        %786 = vmatprep.subr.bf16.mxu0 0
        %787 = vmatpush1.bf16.msra.mxu0 %v769
        %788 = vmatprep.subr.bf16.mxu0 0
        %789 = vmatpush1.bf16.msra.mxu0 %v770
        %790 = vmatprep.subr.bf16.mxu0 0
        %791 = vmatpush1.bf16.msra.mxu0 %v771
        %792 = vmatprep.subr.bf16.mxu0 0
        %793 = vmatpush1.bf16.msra.mxu0 %v772
        %794 = vmatprep.subr.bf16.mxu0 0
        %795 = vmatpush1.bf16.msra.mxu0 %v773
        %796 = vmatprep.subr.bf16.mxu0 0
        %797 = vmatpush1.bf16.msra.mxu0 %v774
        %798 = vmatprep.subr.bf16.mxu0 0
        %799 = vmatpush1.bf16.msra.mxu0 %v775
        %800 = vmatprep.subr.bf16.mxu0 0
        %801 = vmatpush1.bf16.msra.mxu0 0
        %802 = vmatprep.subr.bf16.mxu0 0
        %803 = vmatpush1.bf16.msra.mxu0 0
        %804 = vmatprep.subr.bf16.mxu0 0
        %805 = vmatpush1.bf16.msra.mxu0 0
        %806 = vmatprep.subr.bf16.mxu0 0
        %807 = vmatpush1.bf16.msra.mxu0 0
        %808 = vmatprep.subr.bf16.mxu0 0
        %809 = vmatpush1.bf16.msra.mxu0 0
        %810 = vmatprep.subr.bf16.mxu0 0
        %811 = vmatpush1.bf16.msra.mxu0 0
        %812 = vmatprep.subr.bf16.mxu0 0
        %813 = vmatpush1.bf16.msra.mxu0 0
        %814 = vmatprep.subr.bf16.mxu0 0
        %815 = vmatpush1.bf16.msra.mxu0 0
        %816 = vmatprep.mubr.bf16.mxu0 0
        %817 = vmatmul.mubr.bf16.gmra.mrb[0].mxu0 %v712
        %v818 = vpop.f32.mrb[0].mxu0
        %v819 = vadd.f32 %v734, %v818
        %v820 = vpop.f32.mrb[0].mxu0
        %v821 = vpop.f32.mrb[0].mxu0
        %v822 = vpop.f32.mrb[0].mxu0
        %823 = vdwg.mxu0
        %v824 = vadd.f32 %v819, %v635
        %v825 = vsel %vm605, %v824, 0.0
        %826 = vadd.xlane.f32.xlu0 %v825
        %v827 = vpop.xlane.xlu0 %826
        %v828 = vmul.f32 %v827, %v609
        %v829 = vsub.f32 %v824, %v828
        %v830 = vmul.f32 %v829, %v829
        %v831 = vsel %vm605, %v830, 0.0
        %832 = vadd.xlane.f32.xlu0 %v831
        %v833 = vpop.xlane.xlu0 %832
        %v834 = vmul.f32 %v833, %v609
        %v835 = vadd.f32 %v834, 1e-12
        %v836 = vrsqrt.pop %v835
        %v837 = vmul.f32 %v829, %v836
        %v838 = vld [vmem:[%s11] sm:$0x1]
        %v840 = vlaneseq
        %v841 = vshrl.u32 %v840, 7
        %v842 = vsub.s32 0, %v841
        %v843 = vrot.slane %v838, %v842
        %v845 = vmul.f32 %v837, %v843
        %v846 = vld [vmem:[%s12] sm:$0x1]
        %v848 = vlaneseq
        %v849 = vshrl.u32 %v848, 7
        %v850 = vsub.s32 0, %v849
        %v851 = vrot.slane %v846, %v850
        %v853 = vadd.f32 %v845, %v851
        %854 = vst.msk [vmem:[%s431] sm:$0xff] %vm605, %v853
        %s855 = sand.u32 %s313, 1
        %s856 = scalar_lea.sflag [#allocation3], %s855
        %s857 = sand.u32 %s313, 1
        %s858 = smul.addr %s857, 8
        %s859 = scalar_lea.vmem [#allocation2], %s858
        // Predicated region
        $region73: #{tpu_custom_call.1} parent=71 // pred_check
          %p860 = pneg %p323
        $region74: #{tpu_custom_call.1} parent=71 // pred_check_branch
          %862 = sbr.rel (%p860) target = $region76
        $region75: #{tpu_custom_call.1} parent=71 // pred_region
          %s864 = ssub.s32 128, 128
          %865 = vsyncadd %s856, %s864
          %s866 = smul.addr %s27, 128
          %s867 = scalar_lea.hbm %s13, %s866
          %s869 = sshll.u32 %s859, 4
          %s870 = int_to_ptr.vmem [resolvable:$true] %s869
          %872 = dma.vmem_to_hbm [thread:$0]  %s870, 128, %s867, %s856
        $region76: #{tpu_custom_call.1} parent=71 // pred_fallthru
          _
      $region72: #{tpu_custom_call.1} parent=5 // pred_fallthru
        _
      %p873 = scmp.le.s32.totalorder 2, %s22
      // Predicated region
      $region77: #{tpu_custom_call.1} parent=5 // pred_check
        %p874 = pneg %p873
      $region78: #{tpu_custom_call.1} parent=5 // pred_check_branch
        %876 = sbr.rel (%p874) target = $region80
      $region79: #{tpu_custom_call.1} parent=5 // pred_region
        %s877 = ssub.s32 %s22, 2
        // Predicated region
        $region81: #{tpu_custom_call.1} parent=79 // pred_check
          %p878 = pneg %p329
        $region82: #{tpu_custom_call.1} parent=79 // pred_check_branch
          %880 = sbr.rel (%p878) target = $region84
        $region83: #{tpu_custom_call.1} parent=79 // pred_region
          %s881 = sand.u32 %s314, 1
          %s882 = scalar_lea.sflag [#allocation3], %s881
          %s883 = sand.u32 %s314, 1
          %s884 = smul.addr %s883, 8
          %s885 = scalar_lea.vmem [#allocation2], %s884
          %886 = dma.done %s882, 128
        $region84: #{tpu_custom_call.1} parent=79 // pred_fallthru
          _
      $region80: #{tpu_custom_call.1} parent=5 // pred_fallthru
        _
    $region6: #{tpu_custom_call.1} parent=1 // loop_footer
      %s26 = sadd.s32 1, %s22
    $region7: #{tpu_custom_call.1} parent=1 // loop_footer_branch
      %21 = sbr.rel target = $region3
    $region8: #{tpu_custom_call.1} parent=1 // loop_exit
      _
    %887 = vsyncpa [#allocation3], 1
    %s888 = scalar_lea.sflag [#allocation3], 1
    %889 = vsyncpa %s888, 1

</llo_original>
